<compile_context>
chip_gen: v6e
topology: v6e:2x2x1
jax: 0.10.0
libtpu: 0.0.40
codegen_flags: <defaults>
</compile_context>

<pallas_src>
import functools

import jax
import jax.numpy as jnp
from jax.experimental import pallas as pl
from jax.experimental.pallas import tpu as pltpu


def _wide_attn_kernel(x_ref, wq_ref, wkv_ref, wu_ref, bu_ref, o_ref,
                      kp_ref, vp_ref, *, emb, heads, scale, causal, q_tile):
    # x_ref  : (T, E)      full sequence block for this batch element
    # wq_ref : (E, H*E)    pre-transposed query projection weight
    # wkv_ref: (E, 2*H*E)  [Wk^T | Wv^T] concatenated
    # wu_ref : (H*E, E)    pre-transposed unify weight
    # bu_ref : (1, E)      unify bias
    # kp_ref / vp_ref : (T, H*E) f32 VMEM scratch -- projected keys / values,
    #                   computed once per batch element and reused across
    #                   q-tile steps.
    he = heads * emb
    qi = pl.program_id(1)

    @pl.when(qi == 0)
    def _():
        kvp = jnp.dot(x_ref[...], wkv_ref[...],
                      preferred_element_type=jnp.float32)   # (T, 2*H*E)
        kp_ref[...] = kvp[:, :he]                            # lane-aligned split
        vp_ref[...] = kvp[:, he:]

    # Query rows for this tile, sliced from the resident full block.
    q_start = qi * q_tile
    xq = x_ref[pl.ds(pl.multiple_of(q_start, q_tile), q_tile), :]   # (TQ, E)
    # Fold the 1/sqrt(E) score scale onto the (small) query tile only.
    qp = jnp.dot(xq, wq_ref[...], preferred_element_type=jnp.float32) * scale

    kp = kp_ref[...]            # (T, H*E)
    vp = vp_ref[...]            # (T, H*E)

    tq = q_tile
    tk = kp.shape[0]

    if causal:
        rows = jax.lax.broadcasted_iota(jnp.int32, (tq, tk), 0) + q_start
        cols = jax.lax.broadcasted_iota(jnp.int32, (tq, tk), 1)
        neg = jnp.float32(-1e30)  # finite "-inf": exp underflows to exactly 0

    # dot_general contracting dim 1 of both operands (q @ k^T without a .T).
    dnums = (((1,), (1,)), ((), ()))

    head_outs = []
    for h in range(heads):       # static unrolled loop; heads is small
        lo, hi = h * emb, (h + 1) * emb
        q_h = qp[:, lo:hi]       # (TQ, E)
        k_h = kp[:, lo:hi]       # (TK, E)
        v_h = vp[:, lo:hi]       # (TK, E)

        s = jax.lax.dot_general(q_h, k_h, dnums,
                                preferred_element_type=jnp.float32)  # (TQ, TK)
        if causal:
            s = jnp.where(cols > rows, neg, s)

        m = jnp.max(s, axis=-1, keepdims=True)
        p = jnp.exp(s - m)
        l = jnp.sum(p, axis=-1, keepdims=True)
        p = p * pl.reciprocal(l, approx=True)     # EUP reciprocal, VALU-free

        head_outs.append(jnp.dot(p, v_h, preferred_element_type=jnp.float32))

    # Head-major concat (matches PyTorch view(b, t, h*e)), then a single
    # unify matmul with full H*E contraction plus bias -> one full-tile store.
    attn_cat = jnp.concatenate(head_outs, axis=-1)          # (TQ, H*E)
    out = jnp.dot(attn_cat, wu_ref[...],
                  preferred_element_type=jnp.float32) + bu_ref[...]
    o_ref[...] = out.astype(o_ref.dtype)


def self_attention_wide(x, params, *, emb, heads, mask=False, q_tile=None,
                        compute_dtype=None):
    """Forward pass of SelfAttentionWide.

    x: (N, T, E).  params (PyTorch nn.Linear layout, y = x @ W.T):
      Wq/Wk/Wv: (H*E, E), Wu: (E, H*E), bu: (E,).
    """
    N, T, E = x.shape
    assert E == emb, f"Input embedding dim ({E}) != layer embedding dim ({emb})"
    H = heads
    HE = H * E

    if q_tile is None:
        q_tile = T if T <= 128 else 128
    assert T % q_tile == 0 and (q_tile % 8 == 0 or q_tile == T)
    num_q = T // q_tile

    # One-time host-side weight transposes (kernel does x @ W, no in-kernel .T).
    wq_t = params["Wq"].T                                            # (E, H*E)
    wkv_t = jnp.concatenate([params["Wk"].T, params["Wv"].T], axis=1)  # (E, 2*H*E)
    wu_t = params["Wu"].T                                            # (H*E, E)
    bu = params["bu"].reshape(1, E)   # kept f32 (added after f32 accumulation)

    x_in = x
    if compute_dtype is not None:     # e.g. jnp.bfloat16 for MXU throughput
        x_in = x.astype(compute_dtype)
        wq_t = wq_t.astype(compute_dtype)
        wkv_t = wkv_t.astype(compute_dtype)
        wu_t = wu_t.astype(compute_dtype)

    kernel = functools.partial(
        _wide_attn_kernel, emb=E, heads=H, scale=float(E) ** -0.5,
        causal=mask, q_tile=q_tile)

    out = pl.pallas_call(
        kernel,
        out_shape=jax.ShapeDtypeStruct((N, T, E), x.dtype),
        grid_spec=pltpu.PrefetchScalarGridSpec(
            num_scalar_prefetch=0,
            grid=(N, num_q),
            in_specs=[
                pl.BlockSpec((None, T, E), lambda n, i: (n, 0, 0)),   # x (full seq)
                pl.BlockSpec((E, HE), lambda n, i: (0, 0)),           # Wq^T
                pl.BlockSpec((E, 2 * HE), lambda n, i: (0, 0)),       # [Wk^T|Wv^T]
                pl.BlockSpec((HE, E), lambda n, i: (0, 0)),           # Wu^T
                pl.BlockSpec((1, E), lambda n, i: (0, 0)),            # bias
            ],
            out_specs=pl.BlockSpec((None, q_tile, E), lambda n, i: (n, i, 0)),
            scratch_shapes=[
                pltpu.VMEM((T, HE), jnp.float32),   # cached projected keys
                pltpu.VMEM((T, HE), jnp.float32),   # cached projected values
            ],
        ),
        compiler_params=pltpu.CompilerParams(
            dimension_semantics=("parallel", "arbitrary")),
    )(x_in, wq_t, wkv_t, wu_t, bu)
    return out


def reference_forward(x, params, *, emb, heads, mask=False):
    """Pure-JAX replica of the PyTorch module's forward pass (for checking)."""
    N, T, E = x.shape
    H = heads
    k = x @ params["Wk"].T          # (N, T, H*E)
    q = x @ params["Wq"].T
    v = x @ params["Wv"].T
    k = k.reshape(N, T, H, E).transpose(0, 2, 1, 3)   # (N, H, T, E)
    q = q.reshape(N, T, H, E).transpose(0, 2, 1, 3)
    v = v.reshape(N, T, H, E).transpose(0, 2, 1, 3)
    q = q / (E ** 0.25)
    k = k / (E ** 0.25)
    dot = jnp.einsum("nhqe,nhke->nhqk", q, k)
    if mask:
        keep = jnp.tril(jnp.ones((T, T), dtype=bool))   # mask_ with offset=1
        dot = jnp.where(keep[None, None], dot, -jnp.inf)
    attn = jax.nn.softmax(dot, axis=-1)
    out = jnp.einsum("nhqk,nhke->nhqe", attn, v)
    out = out.transpose(0, 2, 1, 3).reshape(N, T, H * E)
    return out @ params["Wu"].T + params["bu"]


if __name__ == "__main__":
    N, T = 2, 16
    EMB, HEADS = 32, 4
    HE = EMB * HEADS

    key = jax.random.PRNGKey(0)
    kx, kq, kk, kv, kwu, kbu = jax.random.split(key, 6)

    x = jax.random.normal(kx, (N, T, EMB), dtype=jnp.float32)

    # nn.Linear-style uniform init bounds.
    b_in = 1.0 / (EMB ** 0.5)
    b_un = 1.0 / (HE ** 0.5)
    params = {
        "Wq": jax.random.uniform(kq, (HE, EMB), jnp.float32, -b_in, b_in),
        "Wk": jax.random.uniform(kk, (HE, EMB), jnp.float32, -b_in, b_in),
        "Wv": jax.random.uniform(kv, (HE, EMB), jnp.float32, -b_in, b_in),
        "Wu": jax.random.uniform(kwu, (EMB, HE), jnp.float32, -b_un, b_un),
        "bu": jax.random.uniform(kbu, (EMB,), jnp.float32, -b_un, b_un),
    }

    for use_mask in (False, True):   # exercise both plain and `mask_` (causal) paths
        out = self_attention_wide(x, params, emb=EMB, heads=HEADS,
                                  mask=use_mask, q_tile=8)
        out = jax.block_until_ready(out)
        ref = jax.block_until_ready(
            reference_forward(x, params, emb=EMB, heads=HEADS, mask=use_mask))
        assert out.shape == (N, T, EMB)
        err = float(jnp.max(jnp.abs(out - ref)))
        assert jnp.allclose(out, ref, rtol=2e-3, atol=2e-3), (
            f"mask={use_mask}: max abs diff {err}")

    print("KERNEL_OK")
</pallas_src>

<mosaic_0001>
module attributes {stable_mosaic.version = 11 : i64} {
  func.func @_wide_attn_kernel(%arg0: i32, %arg1: i32, %arg2: memref<1x16x32xf32, #tpu.memory_space<vmem>>, %arg3: memref<32x128xf32, #tpu.memory_space<vmem>>, %arg4: memref<32x256xf32, #tpu.memory_space<vmem>>, %arg5: memref<128x32xf32, #tpu.memory_space<vmem>>, %arg6: memref<1x32xf32, #tpu.memory_space<vmem>>, %arg7: memref<1x8x32xf32, #tpu.memory_space<vmem>>, %arg8: memref<16x128xf32, #tpu.memory_space<vmem>>, %arg9: memref<16x128xf32, #tpu.memory_space<vmem>>) attributes {dimension_semantics = [#tpu.dimension_semantics<parallel>, #tpu.dimension_semantics<arbitrary>], iteration_bounds = array<i64: 2, 2>, scalar_prefetch = 0 : i64, scratch_operands = 2 : i64, tpu.core_type = #tpu.core_type<tc>, window_params = [{transform_indices = @transform_0, window_bounds = array<i64: 1, 16, 32>}, {pipeline_mode = #tpu.pipeline_mode<synchronous>, transform_indices = @transform_1, window_bounds = array<i64: 32, 128>}, {pipeline_mode = #tpu.pipeline_mode<synchronous>, transform_indices = @transform_2, window_bounds = array<i64: 32, 256>}, {pipeline_mode = #tpu.pipeline_mode<synchronous>, transform_indices = @transform_3, window_bounds = array<i64: 128, 32>}, {pipeline_mode = #tpu.pipeline_mode<synchronous>, transform_indices = @transform_4, window_bounds = array<i64: 1, 32>}, {transform_indices = @transform_5, window_bounds = array<i64: 1, 8, 32>}]} {
    %c0_i32 = arith.constant 0 : i32
    %0 = arith.cmpi eq, %arg1, %c0_i32 : i32
    %1 = arith.extui %0 : i1 to i32
    %c0_i32_0 = arith.constant 0 : i32
    %2 = arith.cmpi ne, %1, %c0_i32_0 : i32
    scf.if %2 {
      %c0_33 = arith.constant 0 : index
      %c0_34 = arith.constant 0 : index
      %c0_35 = arith.constant 0 : index
      %83 = vector.load %arg2[%c0_33, %c0_34, %c0_35] : memref<1x16x32xf32, #tpu.memory_space<vmem>>, vector<1x16x32xf32>
      %84 = vector.shape_cast %83 : vector<1x16x32xf32> to vector<16x32xf32>
      %c0_36 = arith.constant 0 : index
      %c0_37 = arith.constant 0 : index
      %85 = vector.load %arg4[%c0_36, %c0_37] : memref<32x256xf32, #tpu.memory_space<vmem>>, vector<32x256xf32>
      %cst_38 = arith.constant dense<0.000000e+00> : vector<16x256xf32>
      %86 = tpu.matmul %84, %85, %cst_38 {dimension_numbers = #tpu.dot_dimension_numbers<[1], [0], [0], [1], [0, 0, 1, 1], [], []>} : vector<16x32xf32>, vector<32x256xf32>, vector<16x256xf32> -> vector<16x256xf32>
      %87 = vector.extract_strided_slice %86 {offsets = [0, 0], sizes = [16, 128], strides = [1, 1]} : vector<16x256xf32> to vector<16x128xf32>
      %c0_39 = arith.constant 0 : index
      %c0_40 = arith.constant 0 : index
      %88 = vector.load %arg8[%c0_39, %c0_40] : memref<16x128xf32, #tpu.memory_space<vmem>>, vector<16x128xf32>
      tpu.vector_store %arg8[%c0_39, %c0_40], %87 {strides = array<i32>} : memref<16x128xf32, #tpu.memory_space<vmem>>, vector<16x128xf32>,
      %89 = vector.extract_strided_slice %86 {offsets = [0, 128], sizes = [16, 128], strides = [1, 1]} : vector<16x256xf32> to vector<16x128xf32>
      %c0_41 = arith.constant 0 : index
      %c0_42 = arith.constant 0 : index
      %90 = vector.load %arg9[%c0_41, %c0_42] : memref<16x128xf32, #tpu.memory_space<vmem>>, vector<16x128xf32>
      tpu.vector_store %arg9[%c0_41, %c0_42], %89 {strides = array<i32>} : memref<16x128xf32, #tpu.memory_space<vmem>>, vector<16x128xf32>,
    } else {
    }
    %c8_i32 = arith.constant 8 : i32
    %3 = arith.muli %arg1, %c8_i32 : i32
    %4 = tpu.assume_multiple %3, 8 : i32
    %c0 = arith.constant 0 : index
    %5 = arith.index_cast %4 : i32 to index
    %c0_1 = arith.constant 0 : index
    %6 = vector.load %arg2[%c0, %5, %c0_1] : memref<1x16x32xf32, #tpu.memory_space<vmem>>, vector<1x8x32xf32>
    %7 = vector.shape_cast %6 : vector<1x8x32xf32> to vector<8x32xf32>
    %c0_2 = arith.constant 0 : index
    %c0_3 = arith.constant 0 : index
    %8 = vector.load %arg3[%c0_2, %c0_3] : memref<32x128xf32, #tpu.memory_space<vmem>>, vector<32x128xf32>
    %cst = arith.constant dense<0.000000e+00> : vector<8x128xf32>
    %9 = tpu.matmul %7, %8, %cst {dimension_numbers = #tpu.dot_dimension_numbers<[1], [0], [0], [1], [0, 0, 1, 1], [], []>} : vector<8x32xf32>, vector<32x128xf32>, vector<8x128xf32> -> vector<8x128xf32>
    %cst_4 = arith.constant 0.176776692 : f32
    %10 = vector.broadcast %cst_4 : f32 to vector<8x128xf32>
    %11 = arith.mulf %9, %10 : vector<8x128xf32>
    %c0_5 = arith.constant 0 : index
    %c0_6 = arith.constant 0 : index
    %12 = vector.load %arg8[%c0_5, %c0_6] : memref<16x128xf32, #tpu.memory_space<vmem>>, vector<16x128xf32>
    %c0_7 = arith.constant 0 : index
    %c0_8 = arith.constant 0 : index
    %13 = vector.load %arg9[%c0_7, %c0_8] : memref<16x128xf32, #tpu.memory_space<vmem>>, vector<16x128xf32>
    %14 = vector.extract_strided_slice %11 {offsets = [0, 0], sizes = [8, 32], strides = [1, 1]} : vector<8x128xf32> to vector<8x32xf32>
    %15 = vector.extract_strided_slice %12 {offsets = [0, 0], sizes = [16, 32], strides = [1, 1]} : vector<16x128xf32> to vector<16x32xf32>
    %16 = vector.extract_strided_slice %13 {offsets = [0, 0], sizes = [16, 32], strides = [1, 1]} : vector<16x128xf32> to vector<16x32xf32>
    %cst_9 = arith.constant dense<0.000000e+00> : vector<8x16xf32>
    %17 = tpu.matmul %14, %15, %cst_9 {dimension_numbers = #tpu.dot_dimension_numbers<[1], [1], [0], [0], [0, 0, 1, 0], [], []>} : vector<8x32xf32>, vector<16x32xf32>, vector<8x16xf32> -> vector<8x16xf32>
    %cst_10 = arith.constant dense<0xFF800000> : vector<8xf32>
    %18 = vector.multi_reduction <maximumf>, %17, %cst_10 [1] : vector<8x16xf32> to vector<8xf32>
    %19 = vector.shape_cast %18 : vector<8xf32> to vector<8x1xf32>
    %20 = vector.broadcast %19 : vector<8x1xf32> to vector<8x16xf32>
    %21 = arith.subf %17, %20 : vector<8x16xf32>
    %22 = math.exp %21 : vector<8x16xf32>
    %cst_11 = arith.constant dense<0.000000e+00> : vector<8xf32>
    %23 = vector.multi_reduction <add>, %22, %cst_11 [1] : vector<8x16xf32> to vector<8xf32>
    %24 = vector.shape_cast %23 : vector<8xf32> to vector<8x1xf32>
    %25 = tpu.reciprocal %24 {approx = true} : vector<8x1xf32> -> vector<8x1xf32>
    %26 = vector.broadcast %25 : vector<8x1xf32> to vector<8x16xf32>
    %27 = arith.mulf %22, %26 : vector<8x16xf32>
    %cst_12 = arith.constant dense<0.000000e+00> : vector<8x32xf32>
    %28 = tpu.matmul %27, %16, %cst_12 {dimension_numbers = #tpu.dot_dimension_numbers<[1], [0], [0], [1], [0, 0, 1, 1], [], []>} : vector<8x16xf32>, vector<16x32xf32>, vector<8x32xf32> -> vector<8x32xf32>
    %29 = vector.extract_strided_slice %11 {offsets = [0, 32], sizes = [8, 32], strides = [1, 1]} : vector<8x128xf32> to vector<8x32xf32>
    %30 = vector.extract_strided_slice %12 {offsets = [0, 32], sizes = [16, 32], strides = [1, 1]} : vector<16x128xf32> to vector<16x32xf32>
    %31 = vector.extract_strided_slice %13 {offsets = [0, 32], sizes = [16, 32], strides = [1, 1]} : vector<16x128xf32> to vector<16x32xf32>
    %cst_13 = arith.constant dense<0.000000e+00> : vector<8x16xf32>
    %32 = tpu.matmul %29, %30, %cst_13 {dimension_numbers = #tpu.dot_dimension_numbers<[1], [1], [0], [0], [0, 0, 1, 0], [], []>} : vector<8x32xf32>, vector<16x32xf32>, vector<8x16xf32> -> vector<8x16xf32>
    %cst_14 = arith.constant dense<0xFF800000> : vector<8xf32>
    %33 = vector.multi_reduction <maximumf>, %32, %cst_14 [1] : vector<8x16xf32> to vector<8xf32>
    %34 = vector.shape_cast %33 : vector<8xf32> to vector<8x1xf32>
    %35 = vector.broadcast %34 : vector<8x1xf32> to vector<8x16xf32>
    %36 = arith.subf %32, %35 : vector<8x16xf32>
    %37 = math.exp %36 : vector<8x16xf32>
    %cst_15 = arith.constant dense<0.000000e+00> : vector<8xf32>
    %38 = vector.multi_reduction <add>, %37, %cst_15 [1] : vector<8x16xf32> to vector<8xf32>
    %39 = vector.shape_cast %38 : vector<8xf32> to vector<8x1xf32>
    %40 = tpu.reciprocal %39 {approx = true} : vector<8x1xf32> -> vector<8x1xf32>
    %41 = vector.broadcast %40 : vector<8x1xf32> to vector<8x16xf32>
    %42 = arith.mulf %37, %41 : vector<8x16xf32>
    %cst_16 = arith.constant dense<0.000000e+00> : vector<8x32xf32>
    %43 = tpu.matmul %42, %31, %cst_16 {dimension_numbers = #tpu.dot_dimension_numbers<[1], [0], [0], [1], [0, 0, 1, 1], [], []>} : vector<8x16xf32>, vector<16x32xf32>, vector<8x32xf32> -> vector<8x32xf32>
    %44 = vector.extract_strided_slice %11 {offsets = [0, 64], sizes = [8, 32], strides = [1, 1]} : vector<8x128xf32> to vector<8x32xf32>
    %45 = vector.extract_strided_slice %12 {offsets = [0, 64], sizes = [16, 32], strides = [1, 1]} : vector<16x128xf32> to vector<16x32xf32>
    %46 = vector.extract_strided_slice %13 {offsets = [0, 64], sizes = [16, 32], strides = [1, 1]} : vector<16x128xf32> to vector<16x32xf32>
    %cst_17 = arith.constant dense<0.000000e+00> : vector<8x16xf32>
    %47 = tpu.matmul %44, %45, %cst_17 {dimension_numbers = #tpu.dot_dimension_numbers<[1], [1], [0], [0], [0, 0, 1, 0], [], []>} : vector<8x32xf32>, vector<16x32xf32>, vector<8x16xf32> -> vector<8x16xf32>
    %cst_18 = arith.constant dense<0xFF800000> : vector<8xf32>
    %48 = vector.multi_reduction <maximumf>, %47, %cst_18 [1] : vector<8x16xf32> to vector<8xf32>
    %49 = vector.shape_cast %48 : vector<8xf32> to vector<8x1xf32>
    %50 = vector.broadcast %49 : vector<8x1xf32> to vector<8x16xf32>
    %51 = arith.subf %47, %50 : vector<8x16xf32>
    %52 = math.exp %51 : vector<8x16xf32>
    %cst_19 = arith.constant dense<0.000000e+00> : vector<8xf32>
    %53 = vector.multi_reduction <add>, %52, %cst_19 [1] : vector<8x16xf32> to vector<8xf32>
    %54 = vector.shape_cast %53 : vector<8xf32> to vector<8x1xf32>
    %55 = tpu.reciprocal %54 {approx = true} : vector<8x1xf32> -> vector<8x1xf32>
    %56 = vector.broadcast %55 : vector<8x1xf32> to vector<8x16xf32>
    %57 = arith.mulf %52, %56 : vector<8x16xf32>
    %cst_20 = arith.constant dense<0.000000e+00> : vector<8x32xf32>
    %58 = tpu.matmul %57, %46, %cst_20 {dimension_numbers = #tpu.dot_dimension_numbers<[1], [0], [0], [1], [0, 0, 1, 1], [], []>} : vector<8x16xf32>, vector<16x32xf32>, vector<8x32xf32> -> vector<8x32xf32>
    %59 = vector.extract_strided_slice %11 {offsets = [0, 96], sizes = [8, 32], strides = [1, 1]} : vector<8x128xf32> to vector<8x32xf32>
    %60 = vector.extract_strided_slice %12 {offsets = [0, 96], sizes = [16, 32], strides = [1, 1]} : vector<16x128xf32> to vector<16x32xf32>
    %61 = vector.extract_strided_slice %13 {offsets = [0, 96], sizes = [16, 32], strides = [1, 1]} : vector<16x128xf32> to vector<16x32xf32>
    %cst_21 = arith.constant dense<0.000000e+00> : vector<8x16xf32>
    %62 = tpu.matmul %59, %60, %cst_21 {dimension_numbers = #tpu.dot_dimension_numbers<[1], [1], [0], [0], [0, 0, 1, 0], [], []>} : vector<8x32xf32>, vector<16x32xf32>, vector<8x16xf32> -> vector<8x16xf32>
    %cst_22 = arith.constant dense<0xFF800000> : vector<8xf32>
    %63 = vector.multi_reduction <maximumf>, %62, %cst_22 [1] : vector<8x16xf32> to vector<8xf32>
    %64 = vector.shape_cast %63 : vector<8xf32> to vector<8x1xf32>
    %65 = vector.broadcast %64 : vector<8x1xf32> to vector<8x16xf32>
    %66 = arith.subf %62, %65 : vector<8x16xf32>
    %67 = math.exp %66 : vector<8x16xf32>
    %cst_23 = arith.constant dense<0.000000e+00> : vector<8xf32>
    %68 = vector.multi_reduction <add>, %67, %cst_23 [1] : vector<8x16xf32> to vector<8xf32>
    %69 = vector.shape_cast %68 : vector<8xf32> to vector<8x1xf32>
    %70 = tpu.reciprocal %69 {approx = true} : vector<8x1xf32> -> vector<8x1xf32>
    %71 = vector.broadcast %70 : vector<8x1xf32> to vector<8x16xf32>
    %72 = arith.mulf %67, %71 : vector<8x16xf32>
    %cst_24 = arith.constant dense<0.000000e+00> : vector<8x32xf32>
    %73 = tpu.matmul %72, %61, %cst_24 {dimension_numbers = #tpu.dot_dimension_numbers<[1], [0], [0], [1], [0, 0, 1, 1], [], []>} : vector<8x16xf32>, vector<16x32xf32>, vector<8x32xf32> -> vector<8x32xf32>
    %74 = tpu.concatenate %28, %43, %58, %73 in 1 : vector<8x32xf32>, vector<8x32xf32>, vector<8x32xf32>, vector<8x32xf32> -> vector<8x128xf32>
    %c0_25 = arith.constant 0 : index
    %c0_26 = arith.constant 0 : index
    %75 = vector.load %arg5[%c0_25, %c0_26] : memref<128x32xf32, #tpu.memory_space<vmem>>, vector<128x32xf32>
    %cst_27 = arith.constant dense<0.000000e+00> : vector<8x32xf32>
    %76 = tpu.matmul %74, %75, %cst_27 {dimension_numbers = #tpu.dot_dimension_numbers<[1], [0], [0], [1], [0, 0, 1, 1], [], []>} : vector<8x128xf32>, vector<128x32xf32>, vector<8x32xf32> -> vector<8x32xf32>
    %c0_28 = arith.constant 0 : index
    %c0_29 = arith.constant 0 : index
    %77 = vector.load %arg6[%c0_28, %c0_29] : memref<1x32xf32, #tpu.memory_space<vmem>>, vector<1x32xf32>
    %78 = vector.broadcast %77 : vector<1x32xf32> to vector<8x32xf32>
    %79 = arith.addf %76, %78 : vector<8x32xf32>
    %c0_30 = arith.constant 0 : index
    %c0_31 = arith.constant 0 : index
    %c0_32 = arith.constant 0 : index
    %80 = vector.load %arg7[%c0_30, %c0_31, %c0_32] : memref<1x8x32xf32, #tpu.memory_space<vmem>>, vector<1x8x32xf32>
    %81 = vector.shape_cast %80 : vector<1x8x32xf32> to vector<8x32xf32>
    %82 = vector.shape_cast %79 : vector<8x32xf32> to vector<1x8x32xf32>
    tpu.vector_store %arg7[%c0_30, %c0_31, %c0_32], %82 {strides = array<i32>} : memref<1x8x32xf32, #tpu.memory_space<vmem>>, vector<1x8x32xf32>,
    return
  }
  func.func @transform_0(%arg0: i32, %arg1: i32) -> (i32, i32, i32) {
    %c0_i32 = arith.constant 0 : i32
    %c0_i32_0 = arith.constant 0 : i32
    %c0_i32_1 = arith.constant 0 : i32
    return %arg0, %c0_i32, %c0_i32_0 : i32, i32, i32
  }
  func.func @transform_1(%arg0: i32, %arg1: i32) -> (i32, i32) {
    %c0_i32 = arith.constant 0 : i32
    %c0_i32_0 = arith.constant 0 : i32
    %c0_i32_1 = arith.constant 0 : i32
    return %c0_i32, %c0_i32_0 : i32, i32
  }
  func.func @transform_2(%arg0: i32, %arg1: i32) -> (i32, i32) {
    %c0_i32 = arith.constant 0 : i32
    %c0_i32_0 = arith.constant 0 : i32
    %c0_i32_1 = arith.constant 0 : i32
    return %c0_i32, %c0_i32_0 : i32, i32
  }
  func.func @transform_3(%arg0: i32, %arg1: i32) -> (i32, i32) {
    %c0_i32 = arith.constant 0 : i32
    %c0_i32_0 = arith.constant 0 : i32
    %c0_i32_1 = arith.constant 0 : i32
    return %c0_i32, %c0_i32_0 : i32, i32
  }
  func.func @transform_4(%arg0: i32, %arg1: i32) -> (i32, i32) {
    %c0_i32 = arith.constant 0 : i32
    %c0_i32_0 = arith.constant 0 : i32
    %c0_i32_1 = arith.constant 0 : i32
    return %c0_i32, %c0_i32_0 : i32, i32
  }
  func.func @transform_5(%arg0: i32, %arg1: i32) -> (i32, i32, i32) {
    %c0_i32 = arith.constant 0 : i32
    %c0_i32_0 = arith.constant 0 : i32
    return %arg0, %arg1, %c0_i32 : i32, i32, i32
  }
}

</mosaic_0001>

<llo_original>
// kernel: tpu_custom_call.1
$region0: #{tpu_custom_call.1}
  #allocation0 [shape = 'u32[]', space=smem, size = 0x4, offset = 0x4, fixed_abs, tag = 'smem constant byte address 0x4 - core index']
  #allocation1 [shape = 'u32[144,128]{1,0:T(1,128)}', space=vmem, size = 0x12000, scoped, tag = 'internal scratch']
  #allocation2 [shape = 'f32[16,128]{1,0:T(8,128)}', space=vmem, size = 0x2000, scoped, tag = 'scratch operand']
  #allocation3 [shape = 'f32[16,128]{1,0:T(8,128)}', space=vmem, size = 0x2000, scoped, tag = 'scratch operand']
  %s0 = inlined_call_operand.vmem [shape: f32[2,16,32], index: 0, kind: input, shape index: {}]
  %s1 = inlined_call_operand.vmem [shape: f32[32,128], index: 1, kind: input, shape index: {}]
  %s2 = inlined_call_operand.vmem [shape: f32[32,256], index: 2, kind: input, shape index: {}]
  %s3 = inlined_call_operand.vmem [shape: f32[128,32], index: 3, kind: input, shape index: {}]
  %s4 = inlined_call_operand.vmem [shape: f32[1,32], index: 4, kind: input, shape index: {}]
  %s5 = inlined_call_operand.hbm [shape: f32[2,16,32], index: 5, kind: output, shape index: {}]
  %s6 = sld [smem:[#allocation0]]
  $region57: #{tpu_custom_call.1} parent=0
    _
  %s8 = ssub.s32 1, %s6
  %s9 = scalar_select 0, %s8, %s6
  $region1: #{tpu_custom_call.1} parent=0
    #allocation4 [shape = 'u8[8192]{0}', space=vmem, size = 0x2000, scoped, tag = 'output window, operand 0']
    #allocation5 [shape = 's32[2]{0}', space=sflag, size = 0x8, scoped, tag = 'scoped memory for tpu_custom_call.1']
    %10 = vsyncpa [#allocation5], 0
    %s11 = scalar_lea.sflag [#allocation5], 1
    %12 = vsyncpa %s11, 0
    loop: start=0, step=1, limit=6
    $region2: #{tpu_custom_call.1} parent=1 // loop_pre_header
      _
    $region3: #{tpu_custom_call.1} parent=1 // loop_header
      %s14 = sphi 0, %s18
      %p15 = scmp.ge.s32.totalorder %s14, 6
      %s21 = sphi 0, %s33
      %s22 = sphi 0, %s29
      %s23 = sphi 0, %s21
      %s24 = sphi 0, %s22
      %s25 = sphi 0, %s23
      %s26 = sphi 0, %s24
      %s36 = sphi 0, %s38
      %s39 = sphi 0, %s36
      %s40 = sphi 0, %s39
      %s56 = sphi 0, %s40
      %s60 = sphi 0, %s60
      %s62 = sphi 0, %s60
      %s63 = sphi 0, %s62
      %s77 = sphi 0, %s63
      %s81 = sphi 0, %s81
      %s83 = sphi 0, %s81
      %s84 = sphi 0, %s83
      %s98 = sphi 0, %s84
      %s102 = sphi 0, %s102
      %s104 = sphi 0, %s102
      %s105 = sphi 0, %s104
      %s119 = sphi 0, %s105
      %s123 = sphi 0, %s123
      %s125 = sphi 0, %s123
      %s126 = sphi 0, %s125
      %s140 = sphi 0, %s126
      %s148 = sphi 0, %s150
      %s151 = sphi 0, %s148
      %s152 = sphi 0, %s151
      %s168 = sphi 0, %s152
    $region4: #{tpu_custom_call.1} parent=1 // loop_header_branch
      %17 = sbr.rel (%p15) target = $region8
    $region5: #{tpu_custom_call.1} parent=1 // loop_body
      %s19 = ssub.s32 %s14, 1
      %s20 = ssub.s32 %s14, 2
      %s27 = sadd.s32 1, %s22
      %p28 = scmp.ge.s32.totalorder %s27, 2
      %s29 = scalar_select %p28, 0, %s27
      %s30 = sadd.s32 1, %s21
      %s31 = scalar_select %p28, %s30, %s21
      %p32 = scmp.ge.s32.totalorder %s31, 2
      %s33 = scalar_select %p32, 0, %s31
      %s34 = ssub.s32 %s21, %s33
      %p35 = scmp.eq.s32.totalorder %s34, 0
      %s37 = sadd.s32 %s36, 1
      %s38 = scalar_select %p35, %s36, %s37
      %p41 = pneg %p35
      %p42 = scmp.eq.s32.totalorder %s14, 3
      %p43 = por %p41, %p42
      %p44 = scmp.ne.s32.totalorder %s36, %s39
      %p45 = scmp.eq.s32.totalorder %s14, 0
      %p46 = por %p44, %p45
      %p47 = scmp.ne.s32.totalorder %s36, %s39
      %p48 = scmp.eq.s32.totalorder %s19, 3
      %p49 = por %p47, %p48
      %p50 = scmp.ne.s32.totalorder %s39, %s40
      %p51 = scmp.eq.s32.totalorder %s19, 0
      %p52 = por %p50, %p51
      %p53 = scmp.ne.s32.totalorder %s39, %s40
      %p54 = scmp.eq.s32.totalorder %s20, 3
      %p55 = por %p53, %p54
      %p57 = scmp.ne.s32.totalorder %s40, %s56
      %p58 = scmp.eq.s32.totalorder %s20, 0
      %p59 = por %p57, %p58
      %s61 = sadd.s32 %s60, 1
      %p64 = scmp.eq.s32.totalorder %s14, 3
      %p65 = scmp.ne.s32.totalorder %s60, %s62
      %p66 = scmp.eq.s32.totalorder %s14, 0
      %p67 = por %p65, %p66
      %p68 = scmp.ne.s32.totalorder %s60, %s62
      %p69 = scmp.eq.s32.totalorder %s19, 3
      %p70 = por %p68, %p69
      %p71 = scmp.ne.s32.totalorder %s62, %s63
      %p72 = scmp.eq.s32.totalorder %s19, 0
      %p73 = por %p71, %p72
      %p74 = scmp.ne.s32.totalorder %s62, %s63
      %p75 = scmp.eq.s32.totalorder %s20, 3
      %p76 = por %p74, %p75
      %p78 = scmp.ne.s32.totalorder %s63, %s77
      %p79 = scmp.eq.s32.totalorder %s20, 0
      %p80 = por %p78, %p79
      %s82 = sadd.s32 %s81, 1
      %p85 = scmp.eq.s32.totalorder %s14, 3
      %p86 = scmp.ne.s32.totalorder %s81, %s83
      %p87 = scmp.eq.s32.totalorder %s14, 0
      %p88 = por %p86, %p87
      %p89 = scmp.ne.s32.totalorder %s81, %s83
      %p90 = scmp.eq.s32.totalorder %s19, 3
      %p91 = por %p89, %p90
      %p92 = scmp.ne.s32.totalorder %s83, %s84
      %p93 = scmp.eq.s32.totalorder %s19, 0
      %p94 = por %p92, %p93
      %p95 = scmp.ne.s32.totalorder %s83, %s84
      %p96 = scmp.eq.s32.totalorder %s20, 3
      %p97 = por %p95, %p96
      %p99 = scmp.ne.s32.totalorder %s84, %s98
      %p100 = scmp.eq.s32.totalorder %s20, 0
      %p101 = por %p99, %p100
      %s103 = sadd.s32 %s102, 1
      %p106 = scmp.eq.s32.totalorder %s14, 3
      %p107 = scmp.ne.s32.totalorder %s102, %s104
      %p108 = scmp.eq.s32.totalorder %s14, 0
      %p109 = por %p107, %p108
      %p110 = scmp.ne.s32.totalorder %s102, %s104
      %p111 = scmp.eq.s32.totalorder %s19, 3
      %p112 = por %p110, %p111
      %p113 = scmp.ne.s32.totalorder %s104, %s105
      %p114 = scmp.eq.s32.totalorder %s19, 0
      %p115 = por %p113, %p114
      %p116 = scmp.ne.s32.totalorder %s104, %s105
      %p117 = scmp.eq.s32.totalorder %s20, 3
      %p118 = por %p116, %p117
      %p120 = scmp.ne.s32.totalorder %s105, %s119
      %p121 = scmp.eq.s32.totalorder %s20, 0
      %p122 = por %p120, %p121
      %s124 = sadd.s32 %s123, 1
      %p127 = scmp.eq.s32.totalorder %s14, 3
      %p128 = scmp.ne.s32.totalorder %s123, %s125
      %p129 = scmp.eq.s32.totalorder %s14, 0
      %p130 = por %p128, %p129
      %p131 = scmp.ne.s32.totalorder %s123, %s125
      %p132 = scmp.eq.s32.totalorder %s19, 3
      %p133 = por %p131, %p132
      %p134 = scmp.ne.s32.totalorder %s125, %s126
      %p135 = scmp.eq.s32.totalorder %s19, 0
      %p136 = por %p134, %p135
      %p137 = scmp.ne.s32.totalorder %s125, %s126
      %p138 = scmp.eq.s32.totalorder %s20, 3
      %p139 = por %p137, %p138
      %p141 = scmp.ne.s32.totalorder %s126, %s140
      %p142 = scmp.eq.s32.totalorder %s20, 0
      %p143 = por %p141, %p142
      %s144 = ssub.s32 %s21, %s33
      %s145 = ssub.s32 %s22, %s29
      %s146 = sor.u32 %s144, %s145
      %p147 = scmp.eq.s32.totalorder %s146, 0
      %s149 = sadd.s32 %s148, 1
      %s150 = scalar_select %p147, %s148, %s149
      %p153 = pneg %p147
      %p154 = scmp.eq.s32.totalorder %s14, 3
      %p155 = por %p153, %p154
      %p156 = scmp.ne.s32.totalorder %s148, %s151
      %p157 = scmp.eq.s32.totalorder %s14, 0
      %p158 = por %p156, %p157
      %p159 = scmp.ne.s32.totalorder %s148, %s151
      %p160 = scmp.eq.s32.totalorder %s19, 3
      %p161 = por %p159, %p160
      %p162 = scmp.ne.s32.totalorder %s151, %s152
      %p163 = scmp.eq.s32.totalorder %s19, 0
      %p164 = por %p162, %p163
      %p165 = scmp.ne.s32.totalorder %s151, %s152
      %p166 = scmp.eq.s32.totalorder %s20, 3
      %p167 = por %p165, %p166
      %p169 = scmp.ne.s32.totalorder %s152, %s168
      %p170 = scmp.eq.s32.totalorder %s20, 0
      %p171 = por %p169, %p170
      %p172 = scmp.le.s32.totalorder 1, %s14
      %p173 = scmp.lt.s32.totalorder %s14, 5
      %p174 = pnand %p172, %p173
      %p175 = pneg %p174
      // Predicated region
      $region9: #{tpu_custom_call.1} parent=5 // pred_check
        _
      $region10: #{tpu_custom_call.1} parent=5 // pred_check_branch
        %177 = sbr.rel (%p174) target = $region12
      $region11: #{tpu_custom_call.1} parent=5 // pred_region
        %s178 = ssub.s32 %s14, 1
        // Predicated region
        $region13: #{tpu_custom_call.1} parent=11 // pred_check
          %p179 = pneg %p73
        $region14: #{tpu_custom_call.1} parent=11 // pred_check_branch
          %181 = sbr.rel (%p179) target = $region16
        $region15: #{tpu_custom_call.1} parent=11 // pred_region
          _
        $region16: #{tpu_custom_call.1} parent=11 // pred_fallthru
          _
        // Predicated region
        $region17: #{tpu_custom_call.1} parent=11 // pred_check
          %p182 = pneg %p94
        $region18: #{tpu_custom_call.1} parent=11 // pred_check_branch
          %184 = sbr.rel (%p182) target = $region20
        $region19: #{tpu_custom_call.1} parent=11 // pred_region
          _
        $region20: #{tpu_custom_call.1} parent=11 // pred_fallthru
          _
        // Predicated region
        $region21: #{tpu_custom_call.1} parent=11 // pred_check
          %p185 = pneg %p115
        $region22: #{tpu_custom_call.1} parent=11 // pred_check_branch
          %187 = sbr.rel (%p185) target = $region24
        $region23: #{tpu_custom_call.1} parent=11 // pred_region
          _
        $region24: #{tpu_custom_call.1} parent=11 // pred_fallthru
          _
        // Predicated region
        $region25: #{tpu_custom_call.1} parent=11 // pred_check
          %p188 = pneg %p136
        $region26: #{tpu_custom_call.1} parent=11 // pred_check_branch
          %190 = sbr.rel (%p188) target = $region28
        $region27: #{tpu_custom_call.1} parent=11 // pred_region
          _
        $region28: #{tpu_custom_call.1} parent=11 // pred_fallthru
          _
      $region12: #{tpu_custom_call.1} parent=5 // pred_fallthru
        _
      %p191 = scmp.lt.s32.totalorder %s14, 4
      // Predicated region
      $region29: #{tpu_custom_call.1} parent=5 // pred_check
        %p192 = pneg %p191
      $region30: #{tpu_custom_call.1} parent=5 // pred_check_branch
        %194 = sbr.rel (%p192) target = $region32
      $region31: #{tpu_custom_call.1} parent=5 // pred_region
        // Predicated region
        $region33: #{tpu_custom_call.1} parent=31 // pred_check
          %p195 = pneg %p46
        $region34: #{tpu_custom_call.1} parent=31 // pred_check_branch
          %197 = sbr.rel (%p195) target = $region36
        $region35: #{tpu_custom_call.1} parent=31 // pred_region
          %p198 = scmp.lt.s32.totalorder %s21, 1
          %s199 = scalar_select %p198, %s21, 1
          %s200 = smul.addr %s199, 2
          %s201 = smul.addr %s200, 8
          %s202 = scalar_lea.vmem %s0, %s201
        $region36: #{tpu_custom_call.1} parent=31 // pred_fallthru
          _
      $region32: #{tpu_custom_call.1} parent=5 // pred_fallthru
        _
      %p203 = scmp.le.s32.totalorder 1, %s14
      %p204 = scmp.lt.s32.totalorder %s14, 5
      %p205 = pnand %p203, %p204
      %p206 = pneg %p205
      // Predicated region
      $region37: #{tpu_custom_call.1} parent=5 // pred_check
        _
      $region38: #{tpu_custom_call.1} parent=5 // pred_check_branch
        %208 = sbr.rel (%p205) target = $region40
      $region39: #{tpu_custom_call.1} parent=5 // pred_region
        %s209 = ssub.s32 %s14, 1
        %p210 = scmp.lt.s32.totalorder %s23, 1
        %s211 = scalar_select %p210, %s23, 1
        %s212 = smul.addr %s211, 2
        %s213 = smul.addr %s212, 8
        %s214 = scalar_lea.vmem %s0, %s213
        %p215 = pneg %p52
        %p216 = pneg %p49
        %p217 = pneg %p73
        %p218 = pneg %p70
        %p219 = pneg %p94
        %p220 = pneg %p91
        %p221 = pneg %p115
        %p222 = pneg %p112
        %p223 = pneg %p136
        %p224 = pneg %p133
        %p225 = pneg %p164
        %p226 = pneg %p161
        %s227 = sand.u32 %s151, 1
        %s228 = scalar_lea.sflag [#allocation5], %s227
        %s229 = sand.u32 %s151, 1
        %s230 = smul.addr %s229, 8
        %s231 = scalar_lea.vmem [#allocation4], %s230
        %p232 = scmp.lt.s32.totalorder %s23, 1
        %s233 = scalar_select %p232, %s23, 1
        %s234 = smul.addr %s233, 2
        %s235 = smul.addr %s234, 8
        %s236 = scalar_lea.vmem %s0, %s235
        %p237 = scmp.eq.s32.totalorder %s24, 0
        // Predicated region
        $region41: #{tpu_custom_call.1} parent=39 // pred_check
          %p238 = pneg %p237
        $region42: #{tpu_custom_call.1} parent=39 // pred_check_branch
          %240 = sbr.rel (%p238) target = $region44
        $region43: #{tpu_custom_call.1} parent=39 // pred_region
          %v241 = vld [vmem:[%s236] sm:$0xff]
          %v242 = vld [vmem:[%s236 + $0x8] sm:$0xff]
          %v243 = vld [vmem:[%s2] sm:$0xff]
          %v244 = vld [vmem:[%s2 + $0x8] sm:$0xff]
          %v245 = vld [vmem:[%s2 + $0x10] sm:$0xff]
          %v246 = vld [vmem:[%s2 + $0x18] sm:$0xff]
          %v247 = vld [vmem:[%s2 + $0x20] sm:$0xff]
          %v248 = vld [vmem:[%s2 + $0x28] sm:$0xff]
          %v249 = vld [vmem:[%s2 + $0x30] sm:$0xff]
          %v250 = vld [vmem:[%s2 + $0x38] sm:$0xff]
          %vm251 = vcmask 261120
          %v253 = vsel %vm251, %v241, 0
          %v256 = vsel %vm251, %v242, 0
          %258 = vmatprep.subr.mxu0 0.0
          %259 = vmatpush1.msra.mxu0 0.0
          %260 = vmatprep.subr.mxu0 0.0
          %261 = vmatpush1.msra.mxu0 0.0
          %262 = vmatprep.subr.mxu0 0.0
          %263 = vmatpush1.msra.mxu0 0.0
          %264 = vmatprep.subr.mxu0 0.0
          %265 = vmatpush1.msra.mxu0 0.0
          %266 = vmatprep.subr.mxu0 0.0
          %267 = vmatpush1.msra.mxu0 0.0
          %268 = vmatprep.subr.mxu0 0.0
          %269 = vmatpush1.msra.mxu0 0.0
          %270 = vmatprep.subr.mxu0 0.0
          %271 = vmatpush1.msra.mxu0 0.0
          %272 = vmatprep.subr.mxu0 0.0
          %273 = vmatpush1.msra.mxu0 0.0
          %274 = vmatprep.subr.mxu0 0.0
          %275 = vmatpush1.msra.mxu0 0.0
          %276 = vmatprep.subr.mxu0 0.0
          %277 = vmatpush1.msra.mxu0 0.0
          %278 = vmatprep.subr.mxu0 0.0
          %279 = vmatpush1.msra.mxu0 0.0
          %280 = vmatprep.subr.mxu0 0.0
          %281 = vmatpush1.msra.mxu0 0.0
          %282 = vmatprep.subr.mxu0 %v250
          %283 = vmatpush1.msra.mxu0 %v249
          %284 = vmatprep.subr.mxu0 %v248
          %285 = vmatpush1.msra.mxu0 %v247
          %286 = vmatprep.subr.mxu0 %v246
          %287 = vmatpush1.msra.mxu0 %v245
          %288 = vmatprep.subr.mxu0 %v244
          %289 = vmatpush1.msra.mxu0 %v243
          %290 = vmatprep.subr.mxu0 0.0
          %291 = vmatpush2.msra.mxu0 0.0
          %292 = vmatprep.subr.mxu0 0.0
          %293 = vmatpush2.msra.mxu0 0.0
          %294 = vmatprep.subr.mxu0 0.0
          %295 = vmatpush2.msra.mxu0 0.0
          %296 = vmatprep.subr.mxu0 0.0
          %297 = vmatpush2.msra.mxu0 0.0
          %298 = vmatprep.subr.mxu0 0.0
          %299 = vmatpush2.msra.mxu0 0.0
          %300 = vmatprep.subr.mxu0 0.0
          %301 = vmatpush2.msra.mxu0 0.0
          %302 = vmatprep.subr.mxu0 0.0
          %303 = vmatpush2.msra.mxu0 0.0
          %304 = vmatprep.subr.mxu0 0.0
          %305 = vmatpush2.msra.mxu0 0.0
          %306 = vmatprep.subr.mxu0 0.0
          %307 = vmatpush2.msra.mxu0 0.0
          %308 = vmatprep.subr.mxu0 0.0
          %309 = vmatpush2.msra.mxu0 0.0
          %310 = vmatprep.subr.mxu0 0.0
          %311 = vmatpush2.msra.mxu0 0.0
          %312 = vmatprep.subr.mxu0 0.0
          %313 = vmatpush2.msra.mxu0 0.0
          %314 = vmatprep.subr.mxu0 0.0
          %315 = vmatpush2.msra.mxu0 0.0
          %316 = vmatprep.subr.mxu0 0.0
          %317 = vmatpush2.msra.mxu0 0.0
          %318 = vmatprep.subr.mxu0 0.0
          %319 = vmatpush2.msra.mxu0 0.0
          %320 = vmatprep.subr.mxu0 0.0
          %321 = vmatpush2.msra.mxu0 0.0
          %322 = vmatprep.mubr.f32.mxu0 0.0
          %323 = vmatmul.mubr.f32.gmra.mxu0 %v253
          %v324 = vpop.f32.mrf.mxu0
          %v325 = vadd.f32 0.0, %v324
          %v326 = vpop.f32.mrf.mxu0
          %v327 = vadd.f32 0.0, %v326
          %328 = vmatprep.mubr.f32.mxu0 0.0
          %329 = vmatmul.mubr.f32.gmra.mxu0 %v256
          %v330 = vpop.f32.mrf.mxu0
          %v331 = vadd.f32 0.0, %v330
          %v332 = vpop.f32.mrf.mxu0
          %v333 = vadd.f32 0.0, %v332
          %334 = vdwg.mxu0
          %335 = vst [vmem:[#allocation2] sm:$0xff] %v325
          %336 = vst [vmem:[#allocation2 + $0x8] sm:$0xff] %v331
          %337 = vst [vmem:[#allocation3] sm:$0xff] %v327
          %338 = vst [vmem:[#allocation3 + $0x8] sm:$0xff] %v333
        $region44: #{tpu_custom_call.1} parent=39 // pred_fallthru
          _
        %s339 = smul.u32 %s24, 8
        %s340 = scalar_lea.vmem %s236, %s339
        %v341 = vld [vmem:[%s340] sm:$0xff]
        %v342 = vld [vmem:[%s1] sm:$0xff]
        %v343 = vld [vmem:[%s1 + $0x8] sm:$0xff]
        %v344 = vld [vmem:[%s1 + $0x10] sm:$0xff]
        %v345 = vld [vmem:[%s1 + $0x18] sm:$0xff]
        %vm346 = vcmask 261120
        %v348 = vsel %vm346, %v341, 0
        %350 = vmatprep.subr.mxu0 0.0
        %351 = vmatpush1.msra.mxu0 0.0
        %352 = vmatprep.subr.mxu0 0.0
        %353 = vmatpush1.msra.mxu0 0.0
        %354 = vmatprep.subr.mxu0 0.0
        %355 = vmatpush1.msra.mxu0 0.0
        %356 = vmatprep.subr.mxu0 0.0
        %357 = vmatpush1.msra.mxu0 0.0
        %358 = vmatprep.subr.mxu0 0.0
        %359 = vmatpush1.msra.mxu0 0.0
        %360 = vmatprep.subr.mxu0 0.0
        %361 = vmatpush1.msra.mxu0 0.0
        %362 = vmatprep.subr.mxu0 0.0
        %363 = vmatpush1.msra.mxu0 0.0
        %364 = vmatprep.subr.mxu0 0.0
        %365 = vmatpush1.msra.mxu0 0.0
        %366 = vmatprep.subr.mxu0 0.0
        %367 = vmatpush1.msra.mxu0 0.0
        %368 = vmatprep.subr.mxu0 0.0
        %369 = vmatpush1.msra.mxu0 0.0
        %370 = vmatprep.subr.mxu0 0.0
        %371 = vmatpush1.msra.mxu0 0.0
        %372 = vmatprep.subr.mxu0 0.0
        %373 = vmatpush1.msra.mxu0 0.0
        %374 = vmatprep.subr.mxu0 0.0
        %375 = vmatpush1.msra.mxu0 %v345
        %376 = vmatprep.subr.mxu0 0.0
        %377 = vmatpush1.msra.mxu0 %v344
        %378 = vmatprep.subr.mxu0 0.0
        %379 = vmatpush1.msra.mxu0 %v343
        %380 = vmatprep.subr.mxu0 0.0
        %381 = vmatpush1.msra.mxu0 %v342
        %382 = vmatprep.subr.mxu0 0.0
        %383 = vmatpush2.msra.mxu0 0.0
        %384 = vmatprep.subr.mxu0 0.0
        %385 = vmatpush2.msra.mxu0 0.0
        %386 = vmatprep.subr.mxu0 0.0
        %387 = vmatpush2.msra.mxu0 0.0
        %388 = vmatprep.subr.mxu0 0.0
        %389 = vmatpush2.msra.mxu0 0.0
        %390 = vmatprep.subr.mxu0 0.0
        %391 = vmatpush2.msra.mxu0 0.0
        %392 = vmatprep.subr.mxu0 0.0
        %393 = vmatpush2.msra.mxu0 0.0
        %394 = vmatprep.subr.mxu0 0.0
        %395 = vmatpush2.msra.mxu0 0.0
        %396 = vmatprep.subr.mxu0 0.0
        %397 = vmatpush2.msra.mxu0 0.0
        %398 = vmatprep.subr.mxu0 0.0
        %399 = vmatpush2.msra.mxu0 0.0
        %400 = vmatprep.subr.mxu0 0.0
        %401 = vmatpush2.msra.mxu0 0.0
        %402 = vmatprep.subr.mxu0 0.0
        %403 = vmatpush2.msra.mxu0 0.0
        %404 = vmatprep.subr.mxu0 0.0
        %405 = vmatpush2.msra.mxu0 0.0
        %406 = vmatprep.subr.mxu0 0.0
        %407 = vmatpush2.msra.mxu0 0.0
        %408 = vmatprep.subr.mxu0 0.0
        %409 = vmatpush2.msra.mxu0 0.0
        %410 = vmatprep.subr.mxu0 0.0
        %411 = vmatpush2.msra.mxu0 0.0
        %412 = vmatprep.subr.mxu0 0.0
        %413 = vmatpush2.msra.mxu0 0.0
        %414 = vmatprep.mubr.f32.mxu0 0.0
        %415 = vmatmul.mubr.f32.gmra.mxu0 %v348
        %v416 = vpop.f32.mrf.mxu0
        %v417 = vadd.f32 0.0, %v416
        %v418 = vpop.f32.mrf.mxu0
        %419 = vdwg.mxu0
        %v420 = vmul.f32 %v417, 0.17677669
        %v421 = vld [vmem:[#allocation2] sm:$0xff]
        %v422 = vld [vmem:[#allocation2 + $0x8] sm:$0xff]
        %v423 = vld [vmem:[#allocation3] sm:$0xff]
        %v424 = vld [vmem:[#allocation3 + $0x8] sm:$0xff]
        %v426 = vsel %vm346, %v420, 0
        %v429 = vsel %vm346, %v421, 0
        %v432 = vsel %vm346, %v422, 0
        %434 = vmatprep.subr.mxu0 0.0
        %435 = vmatpush1.xpose.msra.mxu0 0.0
        %436 = vmatprep.subr.mxu0 0.0
        %437 = vmatpush1.xpose.msra.mxu0 0.0
        %438 = vmatprep.subr.mxu0 0.0
        %439 = vmatpush1.xpose.msra.mxu0 0.0
        %440 = vmatprep.subr.mxu0 0.0
        %441 = vmatpush1.xpose.msra.mxu0 0.0
        %442 = vmatprep.subr.mxu0 0.0
        %443 = vmatpush1.xpose.msra.mxu0 0.0
        %444 = vmatprep.subr.mxu0 0.0
        %445 = vmatpush1.xpose.msra.mxu0 0.0
        %446 = vmatprep.subr.mxu0 0.0
        %447 = vmatpush1.xpose.msra.mxu0 0.0
        %448 = vmatprep.subr.mxu0 0.0
        %449 = vmatpush1.xpose.msra.mxu0 0.0
        %450 = vmatprep.subr.mxu0 0.0
        %451 = vmatpush1.xpose.msra.mxu0 0.0
        %452 = vmatprep.subr.mxu0 0.0
        %453 = vmatpush1.xpose.msra.mxu0 0.0
        %454 = vmatprep.subr.mxu0 0.0
        %455 = vmatpush1.xpose.msra.mxu0 0.0
        %456 = vmatprep.subr.mxu0 0.0
        %457 = vmatpush1.xpose.msra.mxu0 0.0
        %458 = vmatprep.subr.mxu0 0.0
        %459 = vmatpush1.xpose.msra.mxu0 0.0
        %460 = vmatprep.subr.mxu0 0.0
        %461 = vmatpush1.xpose.msra.mxu0 0.0
        %462 = vmatprep.subr.mxu0 0.0
        %463 = vmatpush1.xpose.msra.mxu0 %v432
        %464 = vmatprep.subr.mxu0 0.0
        %465 = vmatpush1.xpose.msra.mxu0 %v429
        %466 = vmatprep.subr.mxu0 0.0
        %467 = vmatpush2.xpose.msra.mxu0 0.0
        %468 = vmatprep.subr.mxu0 0.0
        %469 = vmatpush2.xpose.msra.mxu0 0.0
        %470 = vmatprep.subr.mxu0 0.0
        %471 = vmatpush2.xpose.msra.mxu0 0.0
        %472 = vmatprep.subr.mxu0 0.0
        %473 = vmatpush2.xpose.msra.mxu0 0.0
        %474 = vmatprep.subr.mxu0 0.0
        %475 = vmatpush2.xpose.msra.mxu0 0.0
        %476 = vmatprep.subr.mxu0 0.0
        %477 = vmatpush2.xpose.msra.mxu0 0.0
        %478 = vmatprep.subr.mxu0 0.0
        %479 = vmatpush2.xpose.msra.mxu0 0.0
        %480 = vmatprep.subr.mxu0 0.0
        %481 = vmatpush2.xpose.msra.mxu0 0.0
        %482 = vmatprep.subr.mxu0 0.0
        %483 = vmatpush2.xpose.msra.mxu0 0.0
        %484 = vmatprep.subr.mxu0 0.0
        %485 = vmatpush2.xpose.msra.mxu0 0.0
        %486 = vmatprep.subr.mxu0 0.0
        %487 = vmatpush2.xpose.msra.mxu0 0.0
        %488 = vmatprep.subr.mxu0 0.0
        %489 = vmatpush2.xpose.msra.mxu0 0.0
        %490 = vmatprep.subr.mxu0 0.0
        %491 = vmatpush2.xpose.msra.mxu0 0.0
        %492 = vmatprep.subr.mxu0 0.0
        %493 = vmatpush2.xpose.msra.mxu0 0.0
        %494 = vmatprep.subr.mxu0 0.0
        %495 = vmatpush2.xpose.msra.mxu0 0.0
        %496 = vmatprep.subr.mxu0 0.0
        %497 = vmatpush2.xpose.msra.mxu0 0.0
        %498 = vmatprep.mubr.f32.mxu0 0.0
        %499 = vmatmul.mubr.f32.gmra.mxu0 %v426
        %v500 = vpop.f32.mrf.mxu0
        %v501 = vadd.f32 0.0, %v500
        %v502 = vpop.f32.mrf.mxu0
        %503 = vdwg.mxu0
        %vm504 = vcmask 130048
        %v505 = vsel %vm504, %v501, -inf
        %506 = vmax.xlane.f32.xlu0 %v505
        %v507 = vpop.xlane.xlu0 %506
        %v508 = vsub.f32 %v501, %v507
        %v509 = vmul.f32 %v508, 1.442695
        %v510 = vpow.pop %v509
        %v511 = vsel %vm504, %v510, 0.0
        %512 = vadd.xlane.f32.xlu0 %v511
        %v513 = vpop.xlane.xlu0 %512
        %v514 = vrcp.pop %v513
        %v515 = vmul.f32 %v510, %v514
        %v517 = vsel %vm504, %v515, 0
        %519 = vmatprep.subr.mxu0 0.0
        %520 = vmatpush1.msra.mxu0 0.0
        %521 = vmatprep.subr.mxu0 0.0
        %522 = vmatpush1.msra.mxu0 0.0
        %523 = vmatprep.subr.mxu0 0.0
        %524 = vmatpush1.msra.mxu0 0.0
        %525 = vmatprep.subr.mxu0 0.0
        %526 = vmatpush1.msra.mxu0 0.0
        %527 = vmatprep.subr.mxu0 0.0
        %528 = vmatpush1.msra.mxu0 0.0
        %529 = vmatprep.subr.mxu0 0.0
        %530 = vmatpush1.msra.mxu0 0.0
        %531 = vmatprep.subr.mxu0 0.0
        %532 = vmatpush1.msra.mxu0 0.0
        %533 = vmatprep.subr.mxu0 0.0
        %534 = vmatpush1.msra.mxu0 0.0
        %535 = vmatprep.subr.mxu0 0.0
        %536 = vmatpush1.msra.mxu0 0.0
        %537 = vmatprep.subr.mxu0 0.0
        %538 = vmatpush1.msra.mxu0 0.0
        %539 = vmatprep.subr.mxu0 0.0
        %540 = vmatpush1.msra.mxu0 0.0
        %541 = vmatprep.subr.mxu0 0.0
        %542 = vmatpush1.msra.mxu0 0.0
        %543 = vmatprep.subr.mxu0 0.0
        %544 = vmatpush1.msra.mxu0 0.0
        %545 = vmatprep.subr.mxu0 0.0
        %546 = vmatpush1.msra.mxu0 0.0
        %547 = vmatprep.subr.mxu0 0.0
        %548 = vmatpush1.msra.mxu0 %v424
        %549 = vmatprep.subr.mxu0 0.0
        %550 = vmatpush1.msra.mxu0 %v423
        %551 = vmatprep.subr.mxu0 0.0
        %552 = vmatpush2.msra.mxu0 0.0
        %553 = vmatprep.subr.mxu0 0.0
        %554 = vmatpush2.msra.mxu0 0.0
        %555 = vmatprep.subr.mxu0 0.0
        %556 = vmatpush2.msra.mxu0 0.0
        %557 = vmatprep.subr.mxu0 0.0
        %558 = vmatpush2.msra.mxu0 0.0
        %559 = vmatprep.subr.mxu0 0.0
        %560 = vmatpush2.msra.mxu0 0.0
        %561 = vmatprep.subr.mxu0 0.0
        %562 = vmatpush2.msra.mxu0 0.0
        %563 = vmatprep.subr.mxu0 0.0
        %564 = vmatpush2.msra.mxu0 0.0
        %565 = vmatprep.subr.mxu0 0.0
        %566 = vmatpush2.msra.mxu0 0.0
        %567 = vmatprep.subr.mxu0 0.0
        %568 = vmatpush2.msra.mxu0 0.0
        %569 = vmatprep.subr.mxu0 0.0
        %570 = vmatpush2.msra.mxu0 0.0
        %571 = vmatprep.subr.mxu0 0.0
        %572 = vmatpush2.msra.mxu0 0.0
        %573 = vmatprep.subr.mxu0 0.0
        %574 = vmatpush2.msra.mxu0 0.0
        %575 = vmatprep.subr.mxu0 0.0
        %576 = vmatpush2.msra.mxu0 0.0
        %577 = vmatprep.subr.mxu0 0.0
        %578 = vmatpush2.msra.mxu0 0.0
        %579 = vmatprep.subr.mxu0 0.0
        %580 = vmatpush2.msra.mxu0 0.0
        %581 = vmatprep.subr.mxu0 0.0
        %582 = vmatpush2.msra.mxu0 0.0
        %583 = vmatprep.mubr.f32.mxu0 0.0
        %584 = vmatmul.mubr.f32.gmra.mxu0 %v517
        %v585 = vpop.f32.mrf.mxu0
        %v586 = vadd.f32 0.0, %v585
        %v587 = vpop.f32.mrf.mxu0
        %588 = vdwg.mxu0
        %589 = vrot.lane.b32.xlu0 %v420, 96
        %v590 = vpop.permute.xlu0 %589
        %591 = vrot.lane.b32.xlu0 %v421, 96
        %v592 = vpop.permute.xlu0 %591
        %593 = vrot.lane.b32.xlu0 %v422, 96
        %v594 = vpop.permute.xlu0 %593
        %v595 = vsel %vm346, %v590, 0
        %v597 = vsel %vm346, %v592, 0
        %v599 = vsel %vm346, %v594, 0
        %601 = vmatprep.subr.mxu0 0.0
        %602 = vmatpush1.xpose.msra.mxu0 0.0
        %603 = vmatprep.subr.mxu0 0.0
        %604 = vmatpush1.xpose.msra.mxu0 0.0
        %605 = vmatprep.subr.mxu0 0.0
        %606 = vmatpush1.xpose.msra.mxu0 0.0
        %607 = vmatprep.subr.mxu0 0.0
        %608 = vmatpush1.xpose.msra.mxu0 0.0
        %609 = vmatprep.subr.mxu0 0.0
        %610 = vmatpush1.xpose.msra.mxu0 0.0
        %611 = vmatprep.subr.mxu0 0.0
        %612 = vmatpush1.xpose.msra.mxu0 0.0
        %613 = vmatprep.subr.mxu0 0.0
        %614 = vmatpush1.xpose.msra.mxu0 0.0
        %615 = vmatprep.subr.mxu0 0.0
        %616 = vmatpush1.xpose.msra.mxu0 0.0
        %617 = vmatprep.subr.mxu0 0.0
        %618 = vmatpush1.xpose.msra.mxu0 0.0
        %619 = vmatprep.subr.mxu0 0.0
        %620 = vmatpush1.xpose.msra.mxu0 0.0
        %621 = vmatprep.subr.mxu0 0.0
        %622 = vmatpush1.xpose.msra.mxu0 0.0
        %623 = vmatprep.subr.mxu0 0.0
        %624 = vmatpush1.xpose.msra.mxu0 0.0
        %625 = vmatprep.subr.mxu0 0.0
        %626 = vmatpush1.xpose.msra.mxu0 0.0
        %627 = vmatprep.subr.mxu0 0.0
        %628 = vmatpush1.xpose.msra.mxu0 0.0
        %629 = vmatprep.subr.mxu0 0.0
        %630 = vmatpush1.xpose.msra.mxu0 %v599
        %631 = vmatprep.subr.mxu0 0.0
        %632 = vmatpush1.xpose.msra.mxu0 %v597
        %633 = vmatprep.subr.mxu0 0.0
        %634 = vmatpush2.xpose.msra.mxu0 0.0
        %635 = vmatprep.subr.mxu0 0.0
        %636 = vmatpush2.xpose.msra.mxu0 0.0
        %637 = vmatprep.subr.mxu0 0.0
        %638 = vmatpush2.xpose.msra.mxu0 0.0
        %639 = vmatprep.subr.mxu0 0.0
        %640 = vmatpush2.xpose.msra.mxu0 0.0
        %641 = vmatprep.subr.mxu0 0.0
        %642 = vmatpush2.xpose.msra.mxu0 0.0
        %643 = vmatprep.subr.mxu0 0.0
        %644 = vmatpush2.xpose.msra.mxu0 0.0
        %645 = vmatprep.subr.mxu0 0.0
        %646 = vmatpush2.xpose.msra.mxu0 0.0
        %647 = vmatprep.subr.mxu0 0.0
        %648 = vmatpush2.xpose.msra.mxu0 0.0
        %649 = vmatprep.subr.mxu0 0.0
        %650 = vmatpush2.xpose.msra.mxu0 0.0
        %651 = vmatprep.subr.mxu0 0.0
        %652 = vmatpush2.xpose.msra.mxu0 0.0
        %653 = vmatprep.subr.mxu0 0.0
        %654 = vmatpush2.xpose.msra.mxu0 0.0
        %655 = vmatprep.subr.mxu0 0.0
        %656 = vmatpush2.xpose.msra.mxu0 0.0
        %657 = vmatprep.subr.mxu0 0.0
        %658 = vmatpush2.xpose.msra.mxu0 0.0
        %659 = vmatprep.subr.mxu0 0.0
        %660 = vmatpush2.xpose.msra.mxu0 0.0
        %661 = vmatprep.subr.mxu0 0.0
        %662 = vmatpush2.xpose.msra.mxu0 0.0
        %663 = vmatprep.subr.mxu0 0.0
        %664 = vmatpush2.xpose.msra.mxu0 0.0
        %665 = vmatprep.mubr.f32.mxu0 0.0
        %666 = vmatmul.mubr.f32.gmra.mxu0 %v595
        %v667 = vpop.f32.mrf.mxu0
        %v668 = vadd.f32 0.0, %v667
        %v669 = vpop.f32.mrf.mxu0
        %670 = vdwg.mxu0
        %v671 = vsel %vm504, %v668, -inf
        %672 = vmax.xlane.f32.xlu0 %v671
        %v673 = vpop.xlane.xlu0 %672
        %v674 = vsub.f32 %v668, %v673
        %v675 = vmul.f32 %v674, 1.442695
        %v676 = vpow.pop %v675
        %v677 = vsel %vm504, %v676, 0.0
        %678 = vadd.xlane.f32.xlu0 %v677
        %v679 = vpop.xlane.xlu0 %678
        %v680 = vrcp.pop %v679
        %v681 = vmul.f32 %v676, %v680
        %684 = vrot.lane.b32.xlu0 %v423, 96
        %v685 = vpop.permute.xlu0 %684
        %686 = vrot.lane.b32.xlu0 %v424, 96
        %v687 = vpop.permute.xlu0 %686
        %v691 = vsel %vm504, %v681, 0
        %693 = vmatprep.subr.mxu0 0.0
        %694 = vmatpush1.msra.mxu0 0.0
        %695 = vmatprep.subr.mxu0 0.0
        %696 = vmatpush1.msra.mxu0 0.0
        %697 = vmatprep.subr.mxu0 0.0
        %698 = vmatpush1.msra.mxu0 0.0
        %699 = vmatprep.subr.mxu0 0.0
        %700 = vmatpush1.msra.mxu0 0.0
        %701 = vmatprep.subr.mxu0 0.0
        %702 = vmatpush1.msra.mxu0 0.0
        %703 = vmatprep.subr.mxu0 0.0
        %704 = vmatpush1.msra.mxu0 0.0
        %705 = vmatprep.subr.mxu0 0.0
        %706 = vmatpush1.msra.mxu0 0.0
        %707 = vmatprep.subr.mxu0 0.0
        %708 = vmatpush1.msra.mxu0 0.0
        %709 = vmatprep.subr.mxu0 0.0
        %710 = vmatpush1.msra.mxu0 0.0
        %711 = vmatprep.subr.mxu0 0.0
        %712 = vmatpush1.msra.mxu0 0.0
        %713 = vmatprep.subr.mxu0 0.0
        %714 = vmatpush1.msra.mxu0 0.0
        %715 = vmatprep.subr.mxu0 0.0
        %716 = vmatpush1.msra.mxu0 0.0
        %717 = vmatprep.subr.mxu0 0.0
        %718 = vmatpush1.msra.mxu0 0.0
        %719 = vmatprep.subr.mxu0 0.0
        %720 = vmatpush1.msra.mxu0 0.0
        %721 = vmatprep.subr.mxu0 0.0
        %722 = vmatpush1.msra.mxu0 %v687
        %723 = vmatprep.subr.mxu0 0.0
        %724 = vmatpush1.msra.mxu0 %v685
        %725 = vmatprep.subr.mxu0 0.0
        %726 = vmatpush2.msra.mxu0 0.0
        %727 = vmatprep.subr.mxu0 0.0
        %728 = vmatpush2.msra.mxu0 0.0
        %729 = vmatprep.subr.mxu0 0.0
        %730 = vmatpush2.msra.mxu0 0.0
        %731 = vmatprep.subr.mxu0 0.0
        %732 = vmatpush2.msra.mxu0 0.0
        %733 = vmatprep.subr.mxu0 0.0
        %734 = vmatpush2.msra.mxu0 0.0
        %735 = vmatprep.subr.mxu0 0.0
        %736 = vmatpush2.msra.mxu0 0.0
        %737 = vmatprep.subr.mxu0 0.0
        %738 = vmatpush2.msra.mxu0 0.0
        %739 = vmatprep.subr.mxu0 0.0
        %740 = vmatpush2.msra.mxu0 0.0
        %741 = vmatprep.subr.mxu0 0.0
        %742 = vmatpush2.msra.mxu0 0.0
        %743 = vmatprep.subr.mxu0 0.0
        %744 = vmatpush2.msra.mxu0 0.0
        %745 = vmatprep.subr.mxu0 0.0
        %746 = vmatpush2.msra.mxu0 0.0
        %747 = vmatprep.subr.mxu0 0.0
        %748 = vmatpush2.msra.mxu0 0.0
        %749 = vmatprep.subr.mxu0 0.0
        %750 = vmatpush2.msra.mxu0 0.0
        %751 = vmatprep.subr.mxu0 0.0
        %752 = vmatpush2.msra.mxu0 0.0
        %753 = vmatprep.subr.mxu0 0.0
        %754 = vmatpush2.msra.mxu0 0.0
        %755 = vmatprep.subr.mxu0 0.0
        %756 = vmatpush2.msra.mxu0 0.0
        %757 = vmatprep.mubr.f32.mxu0 0.0
        %758 = vmatmul.mubr.f32.gmra.mxu0 %v691
        %v759 = vpop.f32.mrf.mxu0
        %v760 = vadd.f32 0.0, %v759
        %v761 = vpop.f32.mrf.mxu0
        %762 = vdwg.mxu0
        %763 = vrot.lane.b32.xlu0 %v420, 64
        %v764 = vpop.permute.xlu0 %763
        %765 = vrot.lane.b32.xlu0 %v421, 64
        %v766 = vpop.permute.xlu0 %765
        %767 = vrot.lane.b32.xlu0 %v422, 64
        %v768 = vpop.permute.xlu0 %767
        %v769 = vsel %vm346, %v764, 0
        %v771 = vsel %vm346, %v766, 0
        %v773 = vsel %vm346, %v768, 0
        %775 = vmatprep.subr.mxu0 0.0
        %776 = vmatpush1.xpose.msra.mxu0 0.0
        %777 = vmatprep.subr.mxu0 0.0
        %778 = vmatpush1.xpose.msra.mxu0 0.0
        %779 = vmatprep.subr.mxu0 0.0
        %780 = vmatpush1.xpose.msra.mxu0 0.0
        %781 = vmatprep.subr.mxu0 0.0
        %782 = vmatpush1.xpose.msra.mxu0 0.0
        %783 = vmatprep.subr.mxu0 0.0
        %784 = vmatpush1.xpose.msra.mxu0 0.0
        %785 = vmatprep.subr.mxu0 0.0
        %786 = vmatpush1.xpose.msra.mxu0 0.0
        %787 = vmatprep.subr.mxu0 0.0
        %788 = vmatpush1.xpose.msra.mxu0 0.0
        %789 = vmatprep.subr.mxu0 0.0
        %790 = vmatpush1.xpose.msra.mxu0 0.0
        %791 = vmatprep.subr.mxu0 0.0
        %792 = vmatpush1.xpose.msra.mxu0 0.0
        %793 = vmatprep.subr.mxu0 0.0
        %794 = vmatpush1.xpose.msra.mxu0 0.0
        %795 = vmatprep.subr.mxu0 0.0
        %796 = vmatpush1.xpose.msra.mxu0 0.0
        %797 = vmatprep.subr.mxu0 0.0
        %798 = vmatpush1.xpose.msra.mxu0 0.0
        %799 = vmatprep.subr.mxu0 0.0
        %800 = vmatpush1.xpose.msra.mxu0 0.0
        %801 = vmatprep.subr.mxu0 0.0
        %802 = vmatpush1.xpose.msra.mxu0 0.0
        %803 = vmatprep.subr.mxu0 0.0
        %804 = vmatpush1.xpose.msra.mxu0 %v773
        %805 = vmatprep.subr.mxu0 0.0
        %806 = vmatpush1.xpose.msra.mxu0 %v771
        %807 = vmatprep.subr.mxu0 0.0
        %808 = vmatpush2.xpose.msra.mxu0 0.0
        %809 = vmatprep.subr.mxu0 0.0
        %810 = vmatpush2.xpose.msra.mxu0 0.0
        %811 = vmatprep.subr.mxu0 0.0
        %812 = vmatpush2.xpose.msra.mxu0 0.0
        %813 = vmatprep.subr.mxu0 0.0
        %814 = vmatpush2.xpose.msra.mxu0 0.0
        %815 = vmatprep.subr.mxu0 0.0
        %816 = vmatpush2.xpose.msra.mxu0 0.0
        %817 = vmatprep.subr.mxu0 0.0
        %818 = vmatpush2.xpose.msra.mxu0 0.0
        %819 = vmatprep.subr.mxu0 0.0
        %820 = vmatpush2.xpose.msra.mxu0 0.0
        %821 = vmatprep.subr.mxu0 0.0
        %822 = vmatpush2.xpose.msra.mxu0 0.0
        %823 = vmatprep.subr.mxu0 0.0
        %824 = vmatpush2.xpose.msra.mxu0 0.0
        %825 = vmatprep.subr.mxu0 0.0
        %826 = vmatpush2.xpose.msra.mxu0 0.0
        %827 = vmatprep.subr.mxu0 0.0
        %828 = vmatpush2.xpose.msra.mxu0 0.0
        %829 = vmatprep.subr.mxu0 0.0
        %830 = vmatpush2.xpose.msra.mxu0 0.0
        %831 = vmatprep.subr.mxu0 0.0
        %832 = vmatpush2.xpose.msra.mxu0 0.0
        %833 = vmatprep.subr.mxu0 0.0
        %834 = vmatpush2.xpose.msra.mxu0 0.0
        %835 = vmatprep.subr.mxu0 0.0
        %836 = vmatpush2.xpose.msra.mxu0 0.0
        %837 = vmatprep.subr.mxu0 0.0
        %838 = vmatpush2.xpose.msra.mxu0 0.0
        %839 = vmatprep.mubr.f32.mxu0 0.0
        %840 = vmatmul.mubr.f32.gmra.mxu0 %v769
        %v841 = vpop.f32.mrf.mxu0
        %v842 = vadd.f32 0.0, %v841
        %v843 = vpop.f32.mrf.mxu0
        %844 = vdwg.mxu0
        %v845 = vsel %vm504, %v842, -inf
        %846 = vmax.xlane.f32.xlu0 %v845
        %v847 = vpop.xlane.xlu0 %846
        %v848 = vsub.f32 %v842, %v847
        %v849 = vmul.f32 %v848, 1.442695
        %v850 = vpow.pop %v849
        %v851 = vsel %vm504, %v850, 0.0
        %852 = vadd.xlane.f32.xlu0 %v851
        %v853 = vpop.xlane.xlu0 %852
        %v854 = vrcp.pop %v853
        %v855 = vmul.f32 %v850, %v854
        %856 = vrot.lane.b32.xlu0 %v423, 64
        %v857 = vpop.permute.xlu0 %856
        %858 = vrot.lane.b32.xlu0 %v424, 64
        %v859 = vpop.permute.xlu0 %858
        %v863 = vsel %vm504, %v855, 0
        %865 = vmatprep.subr.mxu0 0.0
        %866 = vmatpush1.msra.mxu0 0.0
        %867 = vmatprep.subr.mxu0 0.0
        %868 = vmatpush1.msra.mxu0 0.0
        %869 = vmatprep.subr.mxu0 0.0
        %870 = vmatpush1.msra.mxu0 0.0
        %871 = vmatprep.subr.mxu0 0.0
        %872 = vmatpush1.msra.mxu0 0.0
        %873 = vmatprep.subr.mxu0 0.0
        %874 = vmatpush1.msra.mxu0 0.0
        %875 = vmatprep.subr.mxu0 0.0
        %876 = vmatpush1.msra.mxu0 0.0
        %877 = vmatprep.subr.mxu0 0.0
        %878 = vmatpush1.msra.mxu0 0.0
        %879 = vmatprep.subr.mxu0 0.0
        %880 = vmatpush1.msra.mxu0 0.0
        %881 = vmatprep.subr.mxu0 0.0
        %882 = vmatpush1.msra.mxu0 0.0
        %883 = vmatprep.subr.mxu0 0.0
        %884 = vmatpush1.msra.mxu0 0.0
        %885 = vmatprep.subr.mxu0 0.0
        %886 = vmatpush1.msra.mxu0 0.0
        %887 = vmatprep.subr.mxu0 0.0
        %888 = vmatpush1.msra.mxu0 0.0
        %889 = vmatprep.subr.mxu0 0.0
        %890 = vmatpush1.msra.mxu0 0.0
        %891 = vmatprep.subr.mxu0 0.0
        %892 = vmatpush1.msra.mxu0 0.0
        %893 = vmatprep.subr.mxu0 0.0
        %894 = vmatpush1.msra.mxu0 %v859
        %895 = vmatprep.subr.mxu0 0.0
        %896 = vmatpush1.msra.mxu0 %v857
        %897 = vmatprep.subr.mxu0 0.0
        %898 = vmatpush2.msra.mxu0 0.0
        %899 = vmatprep.subr.mxu0 0.0
        %900 = vmatpush2.msra.mxu0 0.0
        %901 = vmatprep.subr.mxu0 0.0
        %902 = vmatpush2.msra.mxu0 0.0
        %903 = vmatprep.subr.mxu0 0.0
        %904 = vmatpush2.msra.mxu0 0.0
        %905 = vmatprep.subr.mxu0 0.0
        %906 = vmatpush2.msra.mxu0 0.0
        %907 = vmatprep.subr.mxu0 0.0
        %908 = vmatpush2.msra.mxu0 0.0
        %909 = vmatprep.subr.mxu0 0.0
        %910 = vmatpush2.msra.mxu0 0.0
        %911 = vmatprep.subr.mxu0 0.0
        %912 = vmatpush2.msra.mxu0 0.0
        %913 = vmatprep.subr.mxu0 0.0
        %914 = vmatpush2.msra.mxu0 0.0
        %915 = vmatprep.subr.mxu0 0.0
        %916 = vmatpush2.msra.mxu0 0.0
        %917 = vmatprep.subr.mxu0 0.0
        %918 = vmatpush2.msra.mxu0 0.0
        %919 = vmatprep.subr.mxu0 0.0
        %920 = vmatpush2.msra.mxu0 0.0
        %921 = vmatprep.subr.mxu0 0.0
        %922 = vmatpush2.msra.mxu0 0.0
        %923 = vmatprep.subr.mxu0 0.0
        %924 = vmatpush2.msra.mxu0 0.0
        %925 = vmatprep.subr.mxu0 0.0
        %926 = vmatpush2.msra.mxu0 0.0
        %927 = vmatprep.subr.mxu0 0.0
        %928 = vmatpush2.msra.mxu0 0.0
        %929 = vmatprep.mubr.f32.mxu0 0.0
        %930 = vmatmul.mubr.f32.gmra.mxu0 %v863
        %v931 = vpop.f32.mrf.mxu0
        %v932 = vadd.f32 0.0, %v931
        %v933 = vpop.f32.mrf.mxu0
        %934 = vdwg.mxu0
        %935 = vrot.lane.b32.xlu0 %v420, 32
        %v936 = vpop.permute.xlu0 %935
        %937 = vrot.lane.b32.xlu0 %v421, 32
        %v938 = vpop.permute.xlu0 %937
        %939 = vrot.lane.b32.xlu0 %v422, 32
        %v940 = vpop.permute.xlu0 %939
        %v941 = vsel %vm346, %v936, 0
        %v943 = vsel %vm346, %v938, 0
        %v945 = vsel %vm346, %v940, 0
        %947 = vmatprep.subr.mxu0 0.0
        %948 = vmatpush1.xpose.msra.mxu0 0.0
        %949 = vmatprep.subr.mxu0 0.0
        %950 = vmatpush1.xpose.msra.mxu0 0.0
        %951 = vmatprep.subr.mxu0 0.0
        %952 = vmatpush1.xpose.msra.mxu0 0.0
        %953 = vmatprep.subr.mxu0 0.0
        %954 = vmatpush1.xpose.msra.mxu0 0.0
        %955 = vmatprep.subr.mxu0 0.0
        %956 = vmatpush1.xpose.msra.mxu0 0.0
        %957 = vmatprep.subr.mxu0 0.0
        %958 = vmatpush1.xpose.msra.mxu0 0.0
        %959 = vmatprep.subr.mxu0 0.0
        %960 = vmatpush1.xpose.msra.mxu0 0.0
        %961 = vmatprep.subr.mxu0 0.0
        %962 = vmatpush1.xpose.msra.mxu0 0.0
        %963 = vmatprep.subr.mxu0 0.0
        %964 = vmatpush1.xpose.msra.mxu0 0.0
        %965 = vmatprep.subr.mxu0 0.0
        %966 = vmatpush1.xpose.msra.mxu0 0.0
        %967 = vmatprep.subr.mxu0 0.0
        %968 = vmatpush1.xpose.msra.mxu0 0.0
        %969 = vmatprep.subr.mxu0 0.0
        %970 = vmatpush1.xpose.msra.mxu0 0.0
        %971 = vmatprep.subr.mxu0 0.0
        %972 = vmatpush1.xpose.msra.mxu0 0.0
        %973 = vmatprep.subr.mxu0 0.0
        %974 = vmatpush1.xpose.msra.mxu0 0.0
        %975 = vmatprep.subr.mxu0 0.0
        %976 = vmatpush1.xpose.msra.mxu0 %v945
        %977 = vmatprep.subr.mxu0 0.0
        %978 = vmatpush1.xpose.msra.mxu0 %v943
        %979 = vmatprep.subr.mxu0 0.0
        %980 = vmatpush2.xpose.msra.mxu0 0.0
        %981 = vmatprep.subr.mxu0 0.0
        %982 = vmatpush2.xpose.msra.mxu0 0.0
        %983 = vmatprep.subr.mxu0 0.0
        %984 = vmatpush2.xpose.msra.mxu0 0.0
        %985 = vmatprep.subr.mxu0 0.0
        %986 = vmatpush2.xpose.msra.mxu0 0.0
        %987 = vmatprep.subr.mxu0 0.0
        %988 = vmatpush2.xpose.msra.mxu0 0.0
        %989 = vmatprep.subr.mxu0 0.0
        %990 = vmatpush2.xpose.msra.mxu0 0.0
        %991 = vmatprep.subr.mxu0 0.0
        %992 = vmatpush2.xpose.msra.mxu0 0.0
        %993 = vmatprep.subr.mxu0 0.0
        %994 = vmatpush2.xpose.msra.mxu0 0.0
        %995 = vmatprep.subr.mxu0 0.0
        %996 = vmatpush2.xpose.msra.mxu0 0.0
        %997 = vmatprep.subr.mxu0 0.0
        %998 = vmatpush2.xpose.msra.mxu0 0.0
        %999 = vmatprep.subr.mxu0 0.0
        %1000 = vmatpush2.xpose.msra.mxu0 0.0
        %1001 = vmatprep.subr.mxu0 0.0
        %1002 = vmatpush2.xpose.msra.mxu0 0.0
        %1003 = vmatprep.subr.mxu0 0.0
        %1004 = vmatpush2.xpose.msra.mxu0 0.0
        %1005 = vmatprep.subr.mxu0 0.0
        %1006 = vmatpush2.xpose.msra.mxu0 0.0
        %1007 = vmatprep.subr.mxu0 0.0
        %1008 = vmatpush2.xpose.msra.mxu0 0.0
        %1009 = vmatprep.subr.mxu0 0.0
        %1010 = vmatpush2.xpose.msra.mxu0 0.0
        %1011 = vmatprep.mubr.f32.mxu0 0.0
        %1012 = vmatmul.mubr.f32.gmra.mxu0 %v941
        %v1013 = vpop.f32.mrf.mxu0
        %v1014 = vadd.f32 0.0, %v1013
        %v1015 = vpop.f32.mrf.mxu0
        %1016 = vdwg.mxu0
        %v1017 = vsel %vm504, %v1014, -inf
        %1018 = vmax.xlane.f32.xlu0 %v1017
        %v1019 = vpop.xlane.xlu0 %1018
        %v1020 = vsub.f32 %v1014, %v1019
        %v1021 = vmul.f32 %v1020, 1.442695
        %v1022 = vpow.pop %v1021
        %v1023 = vsel %vm504, %v1022, 0.0
        %1024 = vadd.xlane.f32.xlu0 %v1023
        %v1025 = vpop.xlane.xlu0 %1024
        %v1026 = vrcp.pop %v1025
        %v1027 = vmul.f32 %v1022, %v1026
        %1028 = vrot.lane.b32.xlu0 %v423, 32
        %v1029 = vpop.permute.xlu0 %1028
        %1030 = vrot.lane.b32.xlu0 %v424, 32
        %v1031 = vpop.permute.xlu0 %1030
        %v1035 = vsel %vm504, %v1027, 0
        %1037 = vmatprep.subr.mxu0 0.0
        %1038 = vmatpush1.msra.mxu0 0.0
        %1039 = vmatprep.subr.mxu0 0.0
        %1040 = vmatpush1.msra.mxu0 0.0
        %1041 = vmatprep.subr.mxu0 0.0
        %1042 = vmatpush1.msra.mxu0 0.0
        %1043 = vmatprep.subr.mxu0 0.0
        %1044 = vmatpush1.msra.mxu0 0.0
        %1045 = vmatprep.subr.mxu0 0.0
        %1046 = vmatpush1.msra.mxu0 0.0
        %1047 = vmatprep.subr.mxu0 0.0
        %1048 = vmatpush1.msra.mxu0 0.0
        %1049 = vmatprep.subr.mxu0 0.0
        %1050 = vmatpush1.msra.mxu0 0.0
        %1051 = vmatprep.subr.mxu0 0.0
        %1052 = vmatpush1.msra.mxu0 0.0
        %1053 = vmatprep.subr.mxu0 0.0
        %1054 = vmatpush1.msra.mxu0 0.0
        %1055 = vmatprep.subr.mxu0 0.0
        %1056 = vmatpush1.msra.mxu0 0.0
        %1057 = vmatprep.subr.mxu0 0.0
        %1058 = vmatpush1.msra.mxu0 0.0
        %1059 = vmatprep.subr.mxu0 0.0
        %1060 = vmatpush1.msra.mxu0 0.0
        %1061 = vmatprep.subr.mxu0 0.0
        %1062 = vmatpush1.msra.mxu0 0.0
        %1063 = vmatprep.subr.mxu0 0.0
        %1064 = vmatpush1.msra.mxu0 0.0
        %1065 = vmatprep.subr.mxu0 0.0
        %1066 = vmatpush1.msra.mxu0 %v1031
        %1067 = vmatprep.subr.mxu0 0.0
        %1068 = vmatpush1.msra.mxu0 %v1029
        %1069 = vmatprep.subr.mxu0 0.0
        %1070 = vmatpush2.msra.mxu0 0.0
        %1071 = vmatprep.subr.mxu0 0.0
        %1072 = vmatpush2.msra.mxu0 0.0
        %1073 = vmatprep.subr.mxu0 0.0
        %1074 = vmatpush2.msra.mxu0 0.0
        %1075 = vmatprep.subr.mxu0 0.0
        %1076 = vmatpush2.msra.mxu0 0.0
        %1077 = vmatprep.subr.mxu0 0.0
        %1078 = vmatpush2.msra.mxu0 0.0
        %1079 = vmatprep.subr.mxu0 0.0
        %1080 = vmatpush2.msra.mxu0 0.0
        %1081 = vmatprep.subr.mxu0 0.0
        %1082 = vmatpush2.msra.mxu0 0.0
        %1083 = vmatprep.subr.mxu0 0.0
        %1084 = vmatpush2.msra.mxu0 0.0
        %1085 = vmatprep.subr.mxu0 0.0
        %1086 = vmatpush2.msra.mxu0 0.0
        %1087 = vmatprep.subr.mxu0 0.0
        %1088 = vmatpush2.msra.mxu0 0.0
        %1089 = vmatprep.subr.mxu0 0.0
        %1090 = vmatpush2.msra.mxu0 0.0
        %1091 = vmatprep.subr.mxu0 0.0
        %1092 = vmatpush2.msra.mxu0 0.0
        %1093 = vmatprep.subr.mxu0 0.0
        %1094 = vmatpush2.msra.mxu0 0.0
        %1095 = vmatprep.subr.mxu0 0.0
        %1096 = vmatpush2.msra.mxu0 0.0
        %1097 = vmatprep.subr.mxu0 0.0
        %1098 = vmatpush2.msra.mxu0 0.0
        %1099 = vmatprep.subr.mxu0 0.0
        %1100 = vmatpush2.msra.mxu0 0.0
        %1101 = vmatprep.mubr.f32.mxu0 0.0
        %1102 = vmatmul.mubr.f32.gmra.mxu0 %v1035
        %v1103 = vpop.f32.mrf.mxu0
        %v1104 = vadd.f32 0.0, %v1103
        %v1105 = vpop.f32.mrf.mxu0
        %1106 = vdwg.mxu0
        %1108 = vrot.lane.b32.xlu0 %v760, 32
        %v1109 = vpop.permute.xlu0 %1108
        %1112 = vrot.lane.b32.xlu0 %v932, 64
        %v1113 = vpop.permute.xlu0 %1112
        %1116 = vrot.lane.b32.xlu0 %v1104, 96
        %v1117 = vpop.permute.xlu0 %1116
        %v1119 = vsel %vm346, %v586, %v1109
        %vm1120 = vcmask 523264
        %v1121 = vsel %vm1120, %v1119, %v1113
        %vm1122 = vcmask 785408
        %v1123 = vsel %vm1122, %v1121, %v1117
        %v1124 = vld [vmem:[%s3] sm:$0xff]
        %v1125 = vld [vmem:[%s3 + $0x8] sm:$0xff]
        %v1126 = vld [vmem:[%s3 + $0x10] sm:$0xff]
        %v1127 = vld [vmem:[%s3 + $0x18] sm:$0xff]
        %v1128 = vld [vmem:[%s3 + $0x20] sm:$0xff]
        %v1129 = vld [vmem:[%s3 + $0x28] sm:$0xff]
        %v1130 = vld [vmem:[%s3 + $0x30] sm:$0xff]
        %v1131 = vld [vmem:[%s3 + $0x38] sm:$0xff]
        %v1132 = vld [vmem:[%s3 + $0x40] sm:$0xff]
        %v1133 = vld [vmem:[%s3 + $0x48] sm:$0xff]
        %v1134 = vld [vmem:[%s3 + $0x50] sm:$0xff]
        %v1135 = vld [vmem:[%s3 + $0x58] sm:$0xff]
        %v1136 = vld [vmem:[%s3 + $0x60] sm:$0xff]
        %v1137 = vld [vmem:[%s3 + $0x68] sm:$0xff]
        %v1138 = vld [vmem:[%s3 + $0x70] sm:$0xff]
        %v1139 = vld [vmem:[%s3 + $0x78] sm:$0xff]
        %v1140 = vld [vmem:[%s4] sm:$0x1]
        %v1142 = vlaneseq
        %v1143 = vshrl.u32 %v1142, 7
        %v1144 = vsub.s32 0, %v1143
        %v1145 = vrot.slane %v1140, %v1144
        %1147 = vmatprep.subr.mxu0 0.0
        %1148 = vmatpush1.msra.mxu0 %v1139
        %1149 = vmatprep.subr.mxu0 0.0
        %1150 = vmatpush1.msra.mxu0 %v1138
        %1151 = vmatprep.subr.mxu0 0.0
        %1152 = vmatpush1.msra.mxu0 %v1137
        %1153 = vmatprep.subr.mxu0 0.0
        %1154 = vmatpush1.msra.mxu0 %v1136
        %1155 = vmatprep.subr.mxu0 0.0
        %1156 = vmatpush1.msra.mxu0 %v1135
        %1157 = vmatprep.subr.mxu0 0.0
        %1158 = vmatpush1.msra.mxu0 %v1134
        %1159 = vmatprep.subr.mxu0 0.0
        %1160 = vmatpush1.msra.mxu0 %v1133
        %1161 = vmatprep.subr.mxu0 0.0
        %1162 = vmatpush1.msra.mxu0 %v1132
        %1163 = vmatprep.subr.mxu0 0.0
        %1164 = vmatpush1.msra.mxu0 %v1131
        %1165 = vmatprep.subr.mxu0 0.0
        %1166 = vmatpush1.msra.mxu0 %v1130
        %1167 = vmatprep.subr.mxu0 0.0
        %1168 = vmatpush1.msra.mxu0 %v1129
        %1169 = vmatprep.subr.mxu0 0.0
        %1170 = vmatpush1.msra.mxu0 %v1128
        %1171 = vmatprep.subr.mxu0 0.0
        %1172 = vmatpush1.msra.mxu0 %v1127
        %1173 = vmatprep.subr.mxu0 0.0
        %1174 = vmatpush1.msra.mxu0 %v1126
        %1175 = vmatprep.subr.mxu0 0.0
        %1176 = vmatpush1.msra.mxu0 %v1125
        %1177 = vmatprep.subr.mxu0 0.0
        %1178 = vmatpush1.msra.mxu0 %v1124
        %1179 = vmatprep.subr.mxu0 0.0
        %1180 = vmatpush2.msra.mxu0 0.0
        %1181 = vmatprep.subr.mxu0 0.0
        %1182 = vmatpush2.msra.mxu0 0.0
        %1183 = vmatprep.subr.mxu0 0.0
        %1184 = vmatpush2.msra.mxu0 0.0
        %1185 = vmatprep.subr.mxu0 0.0
        %1186 = vmatpush2.msra.mxu0 0.0
        %1187 = vmatprep.subr.mxu0 0.0
        %1188 = vmatpush2.msra.mxu0 0.0
        %1189 = vmatprep.subr.mxu0 0.0
        %1190 = vmatpush2.msra.mxu0 0.0
        %1191 = vmatprep.subr.mxu0 0.0
        %1192 = vmatpush2.msra.mxu0 0.0
        %1193 = vmatprep.subr.mxu0 0.0
        %1194 = vmatpush2.msra.mxu0 0.0
        %1195 = vmatprep.subr.mxu0 0.0
        %1196 = vmatpush2.msra.mxu0 0.0
        %1197 = vmatprep.subr.mxu0 0.0
        %1198 = vmatpush2.msra.mxu0 0.0
        %1199 = vmatprep.subr.mxu0 0.0
        %1200 = vmatpush2.msra.mxu0 0.0
        %1201 = vmatprep.subr.mxu0 0.0
        %1202 = vmatpush2.msra.mxu0 0.0
        %1203 = vmatprep.subr.mxu0 0.0
        %1204 = vmatpush2.msra.mxu0 0.0
        %1205 = vmatprep.subr.mxu0 0.0
        %1206 = vmatpush2.msra.mxu0 0.0
        %1207 = vmatprep.subr.mxu0 0.0
        %1208 = vmatpush2.msra.mxu0 0.0
        %1209 = vmatprep.subr.mxu0 0.0
        %1210 = vmatpush2.msra.mxu0 0.0
        %1211 = vmatprep.mubr.f32.mxu0 0.0
        %1212 = vmatmul.mubr.f32.gmra.mxu0 %v1123
        %v1213 = vpop.f32.mrf.mxu0
        %v1214 = vadd.f32 %v1145, %v1213
        %v1215 = vpop.f32.mrf.mxu0
        %1216 = vdwg.mxu0
        %1217 = vst.msk [vmem:[%s231] sm:$0xff] %vm346, %v1214
        %s1218 = sand.u32 %s151, 1
        %s1219 = scalar_lea.sflag [#allocation5], %s1218
        %s1220 = sand.u32 %s151, 1
        %s1221 = smul.addr %s1220, 8
        %s1222 = scalar_lea.vmem [#allocation4], %s1221
        // Predicated region
        $region45: #{tpu_custom_call.1} parent=39 // pred_check
          %p1223 = pneg %p161
        $region46: #{tpu_custom_call.1} parent=39 // pred_check_branch
          %1225 = sbr.rel (%p1223) target = $region48
        $region47: #{tpu_custom_call.1} parent=39 // pred_region
          %s1227 = ssub.s32 128, 128
          %1228 = vsyncadd %s1219, %s1227
          %s1229 = smul.addr %s23, 2
          %s1230 = sadd.s32 %s24, %s1229
          %s1231 = smul.addr %s1230, 128
          %s1232 = scalar_lea.hbm %s5, %s1231
          %s1234 = sshll.u32 %s1222, 4
          %s1235 = int_to_ptr.vmem [resolvable:$true] %s1234
          %1237 = dma.vmem_to_hbm [thread:$0]  %s1235, 128, %s1232, %s1219
        $region48: #{tpu_custom_call.1} parent=39 // pred_fallthru
          _
      $region40: #{tpu_custom_call.1} parent=5 // pred_fallthru
        _
      %p1238 = scmp.le.s32.totalorder 2, %s14
      // Predicated region
      $region49: #{tpu_custom_call.1} parent=5 // pred_check
        %p1239 = pneg %p1238
      $region50: #{tpu_custom_call.1} parent=5 // pred_check_branch
        %1241 = sbr.rel (%p1239) target = $region52
      $region51: #{tpu_custom_call.1} parent=5 // pred_region
        %s1242 = ssub.s32 %s14, 2
        // Predicated region
        $region53: #{tpu_custom_call.1} parent=51 // pred_check
          %p1243 = pneg %p167
        $region54: #{tpu_custom_call.1} parent=51 // pred_check_branch
          %1245 = sbr.rel (%p1243) target = $region56
        $region55: #{tpu_custom_call.1} parent=51 // pred_region
          %s1246 = sand.u32 %s152, 1
          %s1247 = scalar_lea.sflag [#allocation5], %s1246
          %s1248 = sand.u32 %s152, 1
          %s1249 = smul.addr %s1248, 8
          %s1250 = scalar_lea.vmem [#allocation4], %s1249
          %1251 = dma.done %s1247, 128
        $region56: #{tpu_custom_call.1} parent=51 // pred_fallthru
          _
      $region52: #{tpu_custom_call.1} parent=5 // pred_fallthru
        _
    $region6: #{tpu_custom_call.1} parent=1 // loop_footer
      %s18 = sadd.s32 1, %s14
    $region7: #{tpu_custom_call.1} parent=1 // loop_footer_branch
      %13 = sbr.rel target = $region3
    $region8: #{tpu_custom_call.1} parent=1 // loop_exit
      _
    %1252 = vsyncpa [#allocation5], 1
    %s1253 = scalar_lea.sflag [#allocation5], 1
    %1254 = vsyncpa %s1253, 1

</llo_original>
